<compile_context>
chip_gen: v5e
topology: v5e:2x2
jax: 0.10.0
libtpu: 0.0.40
codegen_flags: <defaults>
</compile_context>

<pallas_src>
import jax
import jax.numpy as jnp
from jax.experimental import pallas as pl
from jax.experimental.pallas import tpu as pltpu


def lstm_kernel(x_ref, wih_ref, whh_ref, b_ref, wfc_ref, bfc_ref, out_ref,
                gx_scr):
    Bp, O = out_ref.shape
    Hp = whh_ref.shape[0]
    TBp, I = x_ref.shape
    T = TBp // Bp

    # Hoisted input projection + fused bias for ALL timesteps (off the serial
    # critical path). gx_scr rows are time-major: rows [t*Bp:(t+1)*Bp] = step t.
    if I == 1:
        # K=1 contraction: a broadcast multiply on the VPU beats an MXU matmul
        # with a badly packed (T*Bp, 1) operand.
        gx_scr[...] = x_ref[...] * wih_ref[...] + b_ref[...]
    else:
        gx_scr[...] = (jnp.dot(x_ref[...], wih_ref[...],
                               preferred_element_type=jnp.float32)
                       + b_ref[...])

    mxu_dtype = whh_ref.dtype  # f32 (exact) or bf16 (faster MXU on v6e/v7x)

    # ---- t = 0 peeled: h == 0 -> recurrent matmul is zero, c = i * g. -------
    g0 = gx_scr[pl.ds(0, Bp), :]
    i_g = jax.nn.sigmoid(g0[:, 0 * Hp:1 * Hp])
    g_g = jnp.tanh(g0[:, 2 * Hp:3 * Hp])
    o_g = jax.nn.sigmoid(g0[:, 3 * Hp:4 * Hp])
    c = i_g * g_g
    h = o_g * jnp.tanh(c)

    # ---- t = 1..T-1: fully unrolled (T is a small static constant). h/c stay
    # vreg-resident; all slices are static and (8,128)-tile aligned. Only
    # h @ W_hh^T sits on the sequential dependent chain.
    for t in range(1, T):
        gates = gx_scr[pl.ds(t * Bp, Bp), :] + jnp.dot(
            h.astype(mxu_dtype), whh_ref[...],
            preferred_element_type=jnp.float32)            # (Bp, 4*Hp)
        i_g = jax.nn.sigmoid(gates[:, 0 * Hp:1 * Hp])
        f_g = jax.nn.sigmoid(gates[:, 1 * Hp:2 * Hp])
        g_g = jnp.tanh(gates[:, 2 * Hp:3 * Hp])
        o_g = jax.nn.sigmoid(gates[:, 3 * Hp:4 * Hp])
        c = f_g * c + i_g * g_g
        h = o_g * jnp.tanh(c)

    # Final Linear on the last hidden state.
    if O == 1:
        # VPU multiply + cross-lane reduce; avoids a padded N=1 MXU matmul.
        fc = jnp.sum(h * wfc_ref[...], axis=-1, keepdims=True) + bfc_ref[...]
    else:
        fc = jax.lax.dot_general(h, wfc_ref[...], (((1,), (1,)), ((), ())),
                                 preferred_element_type=jnp.float32) + bfc_ref[...]
    out_ref[...] = fc.astype(out_ref.dtype)


def prepare_rainfall_lstm_params(w_ih, w_hh, b_ih, b_hh, w_fc, b_fc,
                                 *, mxu_dtype=jnp.float32):
    """One-time weight re-layout (do this at model init, NOT per forward call).

    PyTorch layout in:  w_ih (4H, I), w_hh (4H, H), b_ih/b_hh (4H,),
                        w_fc (O, H), b_fc (O,), gate order (i, f, g, o).
    Out: gate-blocked, transposed, lane/sublane-padded operands; each gate
    occupies its own 128-lane slab so in-kernel gate extraction is a free
    static lane slice. Padded lanes are EXACT zeros (required so padded h/c
    lanes stay 0 through the recurrence)."""
    H = w_hh.shape[1]
    I = w_ih.shape[1]
    O = w_fc.shape[0]
    Hp = ((H + 127) // 128) * 128
    f32 = jnp.float32

    wih_p = jnp.zeros((I, 4 * Hp), f32)
    whh_p = jnp.zeros((Hp, 4 * Hp), f32)
    b_p = jnp.zeros((1, 4 * Hp), f32)
    b_sum = (b_ih + b_hh).astype(f32)
    for g in range(4):
        wih_p = wih_p.at[:, g * Hp:g * Hp + H].set(
            w_ih[g * H:(g + 1) * H, :].T.astype(f32))
        whh_p = whh_p.at[:H, g * Hp:g * Hp + H].set(
            w_hh[g * H:(g + 1) * H, :].T.astype(f32))
        b_p = b_p.at[:, g * Hp:g * Hp + H].set(b_sum[g * H:(g + 1) * H][None, :])

    wfc_p = jnp.zeros((O, Hp), f32).at[:, :H].set(w_fc.astype(f32))  # (O, Hp)
    bfc_p = b_fc.astype(f32).reshape(1, O)                           # (1, O)

    return {
        "wih": wih_p,
        "whh": whh_p.astype(mxu_dtype),   # only the recurrent weight goes bf16
        "b": b_p,
        "wfc": wfc_p,
        "bfc": bfc_p,
    }


@jax.jit
def rainfall_lstm_forward(x, params):
    """x: (B, T, I) float32 (batch_first, matches nn.LSTM(batch_first=True)).
    params: output of prepare_rainfall_lstm_params (cached across calls)."""
    B, T, I = x.shape
    wih, whh, b, wfc, bfc = (params["wih"], params["whh"], params["b"],
                             params["wfc"], params["bfc"])
    Hp = whh.shape[0]
    O = wfc.shape[0]
    Bp = ((B + 7) // 8) * 8
    f32 = jnp.float32

    # Per-call layout plumbing on x only (tiny): batch-first -> time-major,
    # batch padded to Bp rows, flattened to (T*Bp, I).
    x_tm = jnp.transpose(x, (1, 0, 2)).astype(f32)                  # (T, B, I)
    x_p = jnp.zeros((T, Bp, I), f32).at[:, :B, :].set(x_tm)
    x2d = x_p.reshape(T * Bp, I)

    out = pl.pallas_call(
        lstm_kernel,
        out_shape=jax.ShapeDtypeStruct((Bp, O), f32),
        grid=(1,),
        in_specs=[
            pl.BlockSpec((T * Bp, I), lambda i: (0, 0)),    # x (resident, time-major)
            pl.BlockSpec((I, 4 * Hp), lambda i: (0, 0)),    # W_ih^T gate-blocked
            pl.BlockSpec((Hp, 4 * Hp), lambda i: (0, 0)),   # W_hh^T gate-blocked
            pl.BlockSpec((1, 4 * Hp), lambda i: (0, 0)),    # b_ih + b_hh
            pl.BlockSpec((O, Hp), lambda i: (0, 0)),        # W_fc (lane = hidden)
            pl.BlockSpec((1, O), lambda i: (0, 0)),         # b_fc
        ],
        out_specs=pl.BlockSpec((Bp, O), lambda i: (0, 0)),
        scratch_shapes=[pltpu.VMEM((T * Bp, 4 * Hp), f32)],  # hoisted gates_x
    )(x2d, wih, whh, b, wfc, bfc)

    return out[:B, :]


def reference_forward(x, w_ih, w_hh, b_ih, b_hh, w_fc, b_fc):
    """Pure-JAX reference mirroring torch.nn.LSTM(batch_first=True) + Linear."""
    B, T, I = x.shape
    H = w_hh.shape[1]

    def step(carry, x_t):
        h, c = carry
        gates = x_t @ w_ih.T + h @ w_hh.T + b_ih + b_hh
        i = jax.nn.sigmoid(gates[:, 0:H])
        f = jax.nn.sigmoid(gates[:, H:2 * H])
        g = jnp.tanh(gates[:, 2 * H:3 * H])
        o = jax.nn.sigmoid(gates[:, 3 * H:4 * H])
        c = f * c + i * g
        h = o * jnp.tanh(c)
        return (h, c), h

    h0 = jnp.zeros((B, H), jnp.float32)
    c0 = jnp.zeros((B, H), jnp.float32)
    (h_T, _), _ = jax.lax.scan(step, (h0, c0), jnp.transpose(x, (1, 0, 2)))
    return h_T @ w_fc.T + b_fc


if __name__ == "__main__":
    # Module defaults: input_size=1, hidden_size=50, output_size=1
    B, T, I, H, O = 4, 8, 1, 50, 1

    key = jax.random.PRNGKey(0)
    ks = jax.random.split(key, 7)
    scale = 1.0 / jnp.sqrt(H)
    x = jax.random.normal(ks[0], (B, T, I), jnp.float32)
    w_ih = jax.random.uniform(ks[1], (4 * H, I), jnp.float32, -scale, scale)
    w_hh = jax.random.uniform(ks[2], (4 * H, H), jnp.float32, -scale, scale)
    b_ih = jax.random.uniform(ks[3], (4 * H,), jnp.float32, -scale, scale)
    b_hh = jax.random.uniform(ks[4], (4 * H,), jnp.float32, -scale, scale)
    w_fc = jax.random.uniform(ks[5], (O, H), jnp.float32, -scale, scale)
    b_fc = jax.random.uniform(ks[6], (O,), jnp.float32, -scale, scale)

    ref = reference_forward(x, w_ih, w_hh, b_ih, b_hh, w_fc, b_fc)

    # f32 path (exact parity with the reference) -----------------------------
    params_f32 = prepare_rainfall_lstm_params(w_ih, w_hh, b_ih, b_hh, w_fc, b_fc)
    params_f32 = jax.block_until_ready(params_f32)   # one-time prep, cached
    out = jax.block_until_ready(rainfall_lstm_forward(x, params_f32))
    assert out.shape == (B, O)
    assert jnp.allclose(out, ref, atol=1e-4, rtol=1e-4), (out, ref)

    # bf16-recurrent-weight path (v6e/v7x MXU fast path); loose tolerance ----
    params_bf16 = prepare_rainfall_lstm_params(w_ih, w_hh, b_ih, b_hh, w_fc,
                                               b_fc, mxu_dtype=jnp.bfloat16)
    out_bf16 = jax.block_until_ready(rainfall_lstm_forward(x, params_bf16))
    assert jnp.allclose(out_bf16, ref, atol=5e-2, rtol=5e-2), (out_bf16, ref)

    print("KERNEL_OK")
</pallas_src>

<mosaic_0001>
module attributes {stable_mosaic.version = 11 : i64} {
  func.func @lstm_kernel(%arg0: i32, %arg1: memref<64x1xf32, #tpu.memory_space<vmem>>, %arg2: memref<1x512xf32, #tpu.memory_space<vmem>>, %arg3: memref<128x512xf32, #tpu.memory_space<vmem>>, %arg4: memref<1x512xf32, #tpu.memory_space<vmem>>, %arg5: memref<1x128xf32, #tpu.memory_space<vmem>>, %arg6: memref<1x1xf32, #tpu.memory_space<vmem>>, %arg7: memref<8x1xf32, #tpu.memory_space<vmem>>, %arg8: memref<64x512xf32, #tpu.memory_space<vmem>>) attributes {dimension_semantics = [#tpu.dimension_semantics<arbitrary>], iteration_bounds = array<i64: 1>, scalar_prefetch = 0 : i64, scratch_operands = 1 : i64, tpu.core_type = #tpu.core_type<tc>, window_params = [{pipeline_mode = #tpu.pipeline_mode<synchronous>, transform_indices = @transform_0, window_bounds = array<i64: 64, 1>}, {pipeline_mode = #tpu.pipeline_mode<synchronous>, transform_indices = @transform_1, window_bounds = array<i64: 1, 512>}, {pipeline_mode = #tpu.pipeline_mode<synchronous>, transform_indices = @transform_2, window_bounds = array<i64: 128, 512>}, {pipeline_mode = #tpu.pipeline_mode<synchronous>, transform_indices = @transform_3, window_bounds = array<i64: 1, 512>}, {pipeline_mode = #tpu.pipeline_mode<synchronous>, transform_indices = @transform_4, window_bounds = array<i64: 1, 128>}, {pipeline_mode = #tpu.pipeline_mode<synchronous>, transform_indices = @transform_5, window_bounds = array<i64: 1, 1>}, {pipeline_mode = #tpu.pipeline_mode<synchronous>, transform_indices = @transform_6, window_bounds = array<i64: 8, 1>}]} {
    %c0 = arith.constant 0 : index
    %c0_0 = arith.constant 0 : index
    %0 = vector.load %arg1[%c0, %c0_0] : memref<64x1xf32, #tpu.memory_space<vmem>>, vector<64x1xf32>
    %c0_1 = arith.constant 0 : index
    %c0_2 = arith.constant 0 : index
    %1 = vector.load %arg2[%c0_1, %c0_2] : memref<1x512xf32, #tpu.memory_space<vmem>>, vector<1x512xf32>
    %2 = vector.broadcast %0 : vector<64x1xf32> to vector<64x512xf32>
    %3 = vector.broadcast %1 : vector<1x512xf32> to vector<64x512xf32>
    %4 = arith.mulf %2, %3 : vector<64x512xf32>
    %c0_3 = arith.constant 0 : index
    %c0_4 = arith.constant 0 : index
    %5 = vector.load %arg4[%c0_3, %c0_4] : memref<1x512xf32, #tpu.memory_space<vmem>>, vector<1x512xf32>
    %6 = vector.broadcast %5 : vector<1x512xf32> to vector<64x512xf32>
    %7 = arith.addf %4, %6 : vector<64x512xf32>
    %c0_5 = arith.constant 0 : index
    %c0_6 = arith.constant 0 : index
    %8 = vector.load %arg8[%c0_5, %c0_6] : memref<64x512xf32, #tpu.memory_space<vmem>>, vector<64x512xf32>
    tpu.vector_store %arg8[%c0_5, %c0_6], %7 {strides = array<i32>} : memref<64x512xf32, #tpu.memory_space<vmem>>, vector<64x512xf32>,
    %c0_7 = arith.constant 0 : index
    %c0_8 = arith.constant 0 : index
    %9 = vector.load %arg8[%c0_7, %c0_8] : memref<64x512xf32, #tpu.memory_space<vmem>>, vector<8x512xf32>
    %10 = vector.extract_strided_slice %9 {offsets = [0, 0], sizes = [8, 128], strides = [1, 1]} : vector<8x512xf32> to vector<8x128xf32>
    %11 = arith.negf %10 : vector<8x128xf32>
    %12 = math.exp %11 : vector<8x128xf32>
    %cst = arith.constant 1.000000e+00 : f32
    %13 = vector.broadcast %cst : f32 to vector<8x128xf32>
    %14 = arith.addf %13, %12 : vector<8x128xf32>
    %15 = arith.divf %13, %14 : vector<8x128xf32>
    %16 = vector.extract_strided_slice %9 {offsets = [0, 256], sizes = [8, 128], strides = [1, 1]} : vector<8x512xf32> to vector<8x128xf32>
    %17 = math.tanh %16 : vector<8x128xf32>
    %18 = vector.extract_strided_slice %9 {offsets = [0, 384], sizes = [8, 128], strides = [1, 1]} : vector<8x512xf32> to vector<8x128xf32>
    %19 = arith.negf %18 : vector<8x128xf32>
    %20 = math.exp %19 : vector<8x128xf32>
    %cst_9 = arith.constant 1.000000e+00 : f32
    %21 = vector.broadcast %cst_9 : f32 to vector<8x128xf32>
    %22 = arith.addf %21, %20 : vector<8x128xf32>
    %23 = arith.divf %21, %22 : vector<8x128xf32>
    %24 = arith.mulf %15, %17 : vector<8x128xf32>
    %25 = math.tanh %24 : vector<8x128xf32>
    %26 = arith.mulf %23, %25 : vector<8x128xf32>
    %c8 = arith.constant 8 : index
    %c0_10 = arith.constant 0 : index
    %27 = vector.load %arg8[%c8, %c0_10] : memref<64x512xf32, #tpu.memory_space<vmem>>, vector<8x512xf32>
    %c0_11 = arith.constant 0 : index
    %c0_12 = arith.constant 0 : index
    %28 = vector.load %arg3[%c0_11, %c0_12] : memref<128x512xf32, #tpu.memory_space<vmem>>, vector<128x512xf32>
    %cst_13 = arith.constant dense<0.000000e+00> : vector<8x512xf32>
    %29 = tpu.matmul %26, %28, %cst_13 {dimension_numbers = #tpu.dot_dimension_numbers<[1], [0], [0], [1], [0, 0, 1, 1], [], []>} : vector<8x128xf32>, vector<128x512xf32>, vector<8x512xf32> -> vector<8x512xf32>
    %30 = arith.addf %27, %29 : vector<8x512xf32>
    %31 = vector.extract_strided_slice %30 {offsets = [0, 0], sizes = [8, 128], strides = [1, 1]} : vector<8x512xf32> to vector<8x128xf32>
    %32 = arith.negf %31 : vector<8x128xf32>
    %33 = math.exp %32 : vector<8x128xf32>
    %cst_14 = arith.constant 1.000000e+00 : f32
    %34 = vector.broadcast %cst_14 : f32 to vector<8x128xf32>
    %35 = arith.addf %34, %33 : vector<8x128xf32>
    %36 = arith.divf %34, %35 : vector<8x128xf32>
    %37 = vector.extract_strided_slice %30 {offsets = [0, 128], sizes = [8, 128], strides = [1, 1]} : vector<8x512xf32> to vector<8x128xf32>
    %38 = arith.negf %37 : vector<8x128xf32>
    %39 = math.exp %38 : vector<8x128xf32>
    %cst_15 = arith.constant 1.000000e+00 : f32
    %40 = vector.broadcast %cst_15 : f32 to vector<8x128xf32>
    %41 = arith.addf %40, %39 : vector<8x128xf32>
    %42 = arith.divf %40, %41 : vector<8x128xf32>
    %43 = vector.extract_strided_slice %30 {offsets = [0, 256], sizes = [8, 128], strides = [1, 1]} : vector<8x512xf32> to vector<8x128xf32>
    %44 = math.tanh %43 : vector<8x128xf32>
    %45 = vector.extract_strided_slice %30 {offsets = [0, 384], sizes = [8, 128], strides = [1, 1]} : vector<8x512xf32> to vector<8x128xf32>
    %46 = arith.negf %45 : vector<8x128xf32>
    %47 = math.exp %46 : vector<8x128xf32>
    %cst_16 = arith.constant 1.000000e+00 : f32
    %48 = vector.broadcast %cst_16 : f32 to vector<8x128xf32>
    %49 = arith.addf %48, %47 : vector<8x128xf32>
    %50 = arith.divf %48, %49 : vector<8x128xf32>
    %51 = arith.mulf %42, %24 : vector<8x128xf32>
    %52 = arith.mulf %36, %44 : vector<8x128xf32>
    %53 = arith.addf %51, %52 : vector<8x128xf32>
    %54 = math.tanh %53 : vector<8x128xf32>
    %55 = arith.mulf %50, %54 : vector<8x128xf32>
    %c16 = arith.constant 16 : index
    %c0_17 = arith.constant 0 : index
    %56 = vector.load %arg8[%c16, %c0_17] : memref<64x512xf32, #tpu.memory_space<vmem>>, vector<8x512xf32>
    %c0_18 = arith.constant 0 : index
    %c0_19 = arith.constant 0 : index
    %57 = vector.load %arg3[%c0_18, %c0_19] : memref<128x512xf32, #tpu.memory_space<vmem>>, vector<128x512xf32>
    %cst_20 = arith.constant dense<0.000000e+00> : vector<8x512xf32>
    %58 = tpu.matmul %55, %57, %cst_20 {dimension_numbers = #tpu.dot_dimension_numbers<[1], [0], [0], [1], [0, 0, 1, 1], [], []>} : vector<8x128xf32>, vector<128x512xf32>, vector<8x512xf32> -> vector<8x512xf32>
    %59 = arith.addf %56, %58 : vector<8x512xf32>
    %60 = vector.extract_strided_slice %59 {offsets = [0, 0], sizes = [8, 128], strides = [1, 1]} : vector<8x512xf32> to vector<8x128xf32>
    %61 = arith.negf %60 : vector<8x128xf32>
    %62 = math.exp %61 : vector<8x128xf32>
    %cst_21 = arith.constant 1.000000e+00 : f32
    %63 = vector.broadcast %cst_21 : f32 to vector<8x128xf32>
    %64 = arith.addf %63, %62 : vector<8x128xf32>
    %65 = arith.divf %63, %64 : vector<8x128xf32>
    %66 = vector.extract_strided_slice %59 {offsets = [0, 128], sizes = [8, 128], strides = [1, 1]} : vector<8x512xf32> to vector<8x128xf32>
    %67 = arith.negf %66 : vector<8x128xf32>
    %68 = math.exp %67 : vector<8x128xf32>
    %cst_22 = arith.constant 1.000000e+00 : f32
    %69 = vector.broadcast %cst_22 : f32 to vector<8x128xf32>
    %70 = arith.addf %69, %68 : vector<8x128xf32>
    %71 = arith.divf %69, %70 : vector<8x128xf32>
    %72 = vector.extract_strided_slice %59 {offsets = [0, 256], sizes = [8, 128], strides = [1, 1]} : vector<8x512xf32> to vector<8x128xf32>
    %73 = math.tanh %72 : vector<8x128xf32>
    %74 = vector.extract_strided_slice %59 {offsets = [0, 384], sizes = [8, 128], strides = [1, 1]} : vector<8x512xf32> to vector<8x128xf32>
    %75 = arith.negf %74 : vector<8x128xf32>
    %76 = math.exp %75 : vector<8x128xf32>
    %cst_23 = arith.constant 1.000000e+00 : f32
    %77 = vector.broadcast %cst_23 : f32 to vector<8x128xf32>
    %78 = arith.addf %77, %76 : vector<8x128xf32>
    %79 = arith.divf %77, %78 : vector<8x128xf32>
    %80 = arith.mulf %71, %53 : vector<8x128xf32>
    %81 = arith.mulf %65, %73 : vector<8x128xf32>
    %82 = arith.addf %80, %81 : vector<8x128xf32>
    %83 = math.tanh %82 : vector<8x128xf32>
    %84 = arith.mulf %79, %83 : vector<8x128xf32>
    %c24 = arith.constant 24 : index
    %c0_24 = arith.constant 0 : index
    %85 = vector.load %arg8[%c24, %c0_24] : memref<64x512xf32, #tpu.memory_space<vmem>>, vector<8x512xf32>
    %c0_25 = arith.constant 0 : index
    %c0_26 = arith.constant 0 : index
    %86 = vector.load %arg3[%c0_25, %c0_26] : memref<128x512xf32, #tpu.memory_space<vmem>>, vector<128x512xf32>
    %cst_27 = arith.constant dense<0.000000e+00> : vector<8x512xf32>
    %87 = tpu.matmul %84, %86, %cst_27 {dimension_numbers = #tpu.dot_dimension_numbers<[1], [0], [0], [1], [0, 0, 1, 1], [], []>} : vector<8x128xf32>, vector<128x512xf32>, vector<8x512xf32> -> vector<8x512xf32>
    %88 = arith.addf %85, %87 : vector<8x512xf32>
    %89 = vector.extract_strided_slice %88 {offsets = [0, 0], sizes = [8, 128], strides = [1, 1]} : vector<8x512xf32> to vector<8x128xf32>
    %90 = arith.negf %89 : vector<8x128xf32>
    %91 = math.exp %90 : vector<8x128xf32>
    %cst_28 = arith.constant 1.000000e+00 : f32
    %92 = vector.broadcast %cst_28 : f32 to vector<8x128xf32>
    %93 = arith.addf %92, %91 : vector<8x128xf32>
    %94 = arith.divf %92, %93 : vector<8x128xf32>
    %95 = vector.extract_strided_slice %88 {offsets = [0, 128], sizes = [8, 128], strides = [1, 1]} : vector<8x512xf32> to vector<8x128xf32>
    %96 = arith.negf %95 : vector<8x128xf32>
    %97 = math.exp %96 : vector<8x128xf32>
    %cst_29 = arith.constant 1.000000e+00 : f32
    %98 = vector.broadcast %cst_29 : f32 to vector<8x128xf32>
    %99 = arith.addf %98, %97 : vector<8x128xf32>
    %100 = arith.divf %98, %99 : vector<8x128xf32>
    %101 = vector.extract_strided_slice %88 {offsets = [0, 256], sizes = [8, 128], strides = [1, 1]} : vector<8x512xf32> to vector<8x128xf32>
    %102 = math.tanh %101 : vector<8x128xf32>
    %103 = vector.extract_strided_slice %88 {offsets = [0, 384], sizes = [8, 128], strides = [1, 1]} : vector<8x512xf32> to vector<8x128xf32>
    %104 = arith.negf %103 : vector<8x128xf32>
    %105 = math.exp %104 : vector<8x128xf32>
    %cst_30 = arith.constant 1.000000e+00 : f32
    %106 = vector.broadcast %cst_30 : f32 to vector<8x128xf32>
    %107 = arith.addf %106, %105 : vector<8x128xf32>
    %108 = arith.divf %106, %107 : vector<8x128xf32>
    %109 = arith.mulf %100, %82 : vector<8x128xf32>
    %110 = arith.mulf %94, %102 : vector<8x128xf32>
    %111 = arith.addf %109, %110 : vector<8x128xf32>
    %112 = math.tanh %111 : vector<8x128xf32>
    %113 = arith.mulf %108, %112 : vector<8x128xf32>
    %c32 = arith.constant 32 : index
    %c0_31 = arith.constant 0 : index
    %114 = vector.load %arg8[%c32, %c0_31] : memref<64x512xf32, #tpu.memory_space<vmem>>, vector<8x512xf32>
    %c0_32 = arith.constant 0 : index
    %c0_33 = arith.constant 0 : index
    %115 = vector.load %arg3[%c0_32, %c0_33] : memref<128x512xf32, #tpu.memory_space<vmem>>, vector<128x512xf32>
    %cst_34 = arith.constant dense<0.000000e+00> : vector<8x512xf32>
    %116 = tpu.matmul %113, %115, %cst_34 {dimension_numbers = #tpu.dot_dimension_numbers<[1], [0], [0], [1], [0, 0, 1, 1], [], []>} : vector<8x128xf32>, vector<128x512xf32>, vector<8x512xf32> -> vector<8x512xf32>
    %117 = arith.addf %114, %116 : vector<8x512xf32>
    %118 = vector.extract_strided_slice %117 {offsets = [0, 0], sizes = [8, 128], strides = [1, 1]} : vector<8x512xf32> to vector<8x128xf32>
    %119 = arith.negf %118 : vector<8x128xf32>
    %120 = math.exp %119 : vector<8x128xf32>
    %cst_35 = arith.constant 1.000000e+00 : f32
    %121 = vector.broadcast %cst_35 : f32 to vector<8x128xf32>
    %122 = arith.addf %121, %120 : vector<8x128xf32>
    %123 = arith.divf %121, %122 : vector<8x128xf32>
    %124 = vector.extract_strided_slice %117 {offsets = [0, 128], sizes = [8, 128], strides = [1, 1]} : vector<8x512xf32> to vector<8x128xf32>
    %125 = arith.negf %124 : vector<8x128xf32>
    %126 = math.exp %125 : vector<8x128xf32>
    %cst_36 = arith.constant 1.000000e+00 : f32
    %127 = vector.broadcast %cst_36 : f32 to vector<8x128xf32>
    %128 = arith.addf %127, %126 : vector<8x128xf32>
    %129 = arith.divf %127, %128 : vector<8x128xf32>
    %130 = vector.extract_strided_slice %117 {offsets = [0, 256], sizes = [8, 128], strides = [1, 1]} : vector<8x512xf32> to vector<8x128xf32>
    %131 = math.tanh %130 : vector<8x128xf32>
    %132 = vector.extract_strided_slice %117 {offsets = [0, 384], sizes = [8, 128], strides = [1, 1]} : vector<8x512xf32> to vector<8x128xf32>
    %133 = arith.negf %132 : vector<8x128xf32>
    %134 = math.exp %133 : vector<8x128xf32>
    %cst_37 = arith.constant 1.000000e+00 : f32
    %135 = vector.broadcast %cst_37 : f32 to vector<8x128xf32>
    %136 = arith.addf %135, %134 : vector<8x128xf32>
    %137 = arith.divf %135, %136 : vector<8x128xf32>
    %138 = arith.mulf %129, %111 : vector<8x128xf32>
    %139 = arith.mulf %123, %131 : vector<8x128xf32>
    %140 = arith.addf %138, %139 : vector<8x128xf32>
    %141 = math.tanh %140 : vector<8x128xf32>
    %142 = arith.mulf %137, %141 : vector<8x128xf32>
    %c40 = arith.constant 40 : index
    %c0_38 = arith.constant 0 : index
    %143 = vector.load %arg8[%c40, %c0_38] : memref<64x512xf32, #tpu.memory_space<vmem>>, vector<8x512xf32>
    %c0_39 = arith.constant 0 : index
    %c0_40 = arith.constant 0 : index
    %144 = vector.load %arg3[%c0_39, %c0_40] : memref<128x512xf32, #tpu.memory_space<vmem>>, vector<128x512xf32>
    %cst_41 = arith.constant dense<0.000000e+00> : vector<8x512xf32>
    %145 = tpu.matmul %142, %144, %cst_41 {dimension_numbers = #tpu.dot_dimension_numbers<[1], [0], [0], [1], [0, 0, 1, 1], [], []>} : vector<8x128xf32>, vector<128x512xf32>, vector<8x512xf32> -> vector<8x512xf32>
    %146 = arith.addf %143, %145 : vector<8x512xf32>
    %147 = vector.extract_strided_slice %146 {offsets = [0, 0], sizes = [8, 128], strides = [1, 1]} : vector<8x512xf32> to vector<8x128xf32>
    %148 = arith.negf %147 : vector<8x128xf32>
    %149 = math.exp %148 : vector<8x128xf32>
    %cst_42 = arith.constant 1.000000e+00 : f32
    %150 = vector.broadcast %cst_42 : f32 to vector<8x128xf32>
    %151 = arith.addf %150, %149 : vector<8x128xf32>
    %152 = arith.divf %150, %151 : vector<8x128xf32>
    %153 = vector.extract_strided_slice %146 {offsets = [0, 128], sizes = [8, 128], strides = [1, 1]} : vector<8x512xf32> to vector<8x128xf32>
    %154 = arith.negf %153 : vector<8x128xf32>
    %155 = math.exp %154 : vector<8x128xf32>
    %cst_43 = arith.constant 1.000000e+00 : f32
    %156 = vector.broadcast %cst_43 : f32 to vector<8x128xf32>
    %157 = arith.addf %156, %155 : vector<8x128xf32>
    %158 = arith.divf %156, %157 : vector<8x128xf32>
    %159 = vector.extract_strided_slice %146 {offsets = [0, 256], sizes = [8, 128], strides = [1, 1]} : vector<8x512xf32> to vector<8x128xf32>
    %160 = math.tanh %159 : vector<8x128xf32>
    %161 = vector.extract_strided_slice %146 {offsets = [0, 384], sizes = [8, 128], strides = [1, 1]} : vector<8x512xf32> to vector<8x128xf32>
    %162 = arith.negf %161 : vector<8x128xf32>
    %163 = math.exp %162 : vector<8x128xf32>
    %cst_44 = arith.constant 1.000000e+00 : f32
    %164 = vector.broadcast %cst_44 : f32 to vector<8x128xf32>
    %165 = arith.addf %164, %163 : vector<8x128xf32>
    %166 = arith.divf %164, %165 : vector<8x128xf32>
    %167 = arith.mulf %158, %140 : vector<8x128xf32>
    %168 = arith.mulf %152, %160 : vector<8x128xf32>
    %169 = arith.addf %167, %168 : vector<8x128xf32>
    %170 = math.tanh %169 : vector<8x128xf32>
    %171 = arith.mulf %166, %170 : vector<8x128xf32>
    %c48 = arith.constant 48 : index
    %c0_45 = arith.constant 0 : index
    %172 = vector.load %arg8[%c48, %c0_45] : memref<64x512xf32, #tpu.memory_space<vmem>>, vector<8x512xf32>
    %c0_46 = arith.constant 0 : index
    %c0_47 = arith.constant 0 : index
    %173 = vector.load %arg3[%c0_46, %c0_47] : memref<128x512xf32, #tpu.memory_space<vmem>>, vector<128x512xf32>
    %cst_48 = arith.constant dense<0.000000e+00> : vector<8x512xf32>
    %174 = tpu.matmul %171, %173, %cst_48 {dimension_numbers = #tpu.dot_dimension_numbers<[1], [0], [0], [1], [0, 0, 1, 1], [], []>} : vector<8x128xf32>, vector<128x512xf32>, vector<8x512xf32> -> vector<8x512xf32>
    %175 = arith.addf %172, %174 : vector<8x512xf32>
    %176 = vector.extract_strided_slice %175 {offsets = [0, 0], sizes = [8, 128], strides = [1, 1]} : vector<8x512xf32> to vector<8x128xf32>
    %177 = arith.negf %176 : vector<8x128xf32>
    %178 = math.exp %177 : vector<8x128xf32>
    %cst_49 = arith.constant 1.000000e+00 : f32
    %179 = vector.broadcast %cst_49 : f32 to vector<8x128xf32>
    %180 = arith.addf %179, %178 : vector<8x128xf32>
    %181 = arith.divf %179, %180 : vector<8x128xf32>
    %182 = vector.extract_strided_slice %175 {offsets = [0, 128], sizes = [8, 128], strides = [1, 1]} : vector<8x512xf32> to vector<8x128xf32>
    %183 = arith.negf %182 : vector<8x128xf32>
    %184 = math.exp %183 : vector<8x128xf32>
    %cst_50 = arith.constant 1.000000e+00 : f32
    %185 = vector.broadcast %cst_50 : f32 to vector<8x128xf32>
    %186 = arith.addf %185, %184 : vector<8x128xf32>
    %187 = arith.divf %185, %186 : vector<8x128xf32>
    %188 = vector.extract_strided_slice %175 {offsets = [0, 256], sizes = [8, 128], strides = [1, 1]} : vector<8x512xf32> to vector<8x128xf32>
    %189 = math.tanh %188 : vector<8x128xf32>
    %190 = vector.extract_strided_slice %175 {offsets = [0, 384], sizes = [8, 128], strides = [1, 1]} : vector<8x512xf32> to vector<8x128xf32>
    %191 = arith.negf %190 : vector<8x128xf32>
    %192 = math.exp %191 : vector<8x128xf32>
    %cst_51 = arith.constant 1.000000e+00 : f32
    %193 = vector.broadcast %cst_51 : f32 to vector<8x128xf32>
    %194 = arith.addf %193, %192 : vector<8x128xf32>
    %195 = arith.divf %193, %194 : vector<8x128xf32>
    %196 = arith.mulf %187, %169 : vector<8x128xf32>
    %197 = arith.mulf %181, %189 : vector<8x128xf32>
    %198 = arith.addf %196, %197 : vector<8x128xf32>
    %199 = math.tanh %198 : vector<8x128xf32>
    %200 = arith.mulf %195, %199 : vector<8x128xf32>
    %c56 = arith.constant 56 : index
    %c0_52 = arith.constant 0 : index
    %201 = vector.load %arg8[%c56, %c0_52] : memref<64x512xf32, #tpu.memory_space<vmem>>, vector<8x512xf32>
    %c0_53 = arith.constant 0 : index
    %c0_54 = arith.constant 0 : index
    %202 = vector.load %arg3[%c0_53, %c0_54] : memref<128x512xf32, #tpu.memory_space<vmem>>, vector<128x512xf32>
    %cst_55 = arith.constant dense<0.000000e+00> : vector<8x512xf32>
    %203 = tpu.matmul %200, %202, %cst_55 {dimension_numbers = #tpu.dot_dimension_numbers<[1], [0], [0], [1], [0, 0, 1, 1], [], []>} : vector<8x128xf32>, vector<128x512xf32>, vector<8x512xf32> -> vector<8x512xf32>
    %204 = arith.addf %201, %203 : vector<8x512xf32>
    %205 = vector.extract_strided_slice %204 {offsets = [0, 0], sizes = [8, 128], strides = [1, 1]} : vector<8x512xf32> to vector<8x128xf32>
    %206 = arith.negf %205 : vector<8x128xf32>
    %207 = math.exp %206 : vector<8x128xf32>
    %cst_56 = arith.constant 1.000000e+00 : f32
    %208 = vector.broadcast %cst_56 : f32 to vector<8x128xf32>
    %209 = arith.addf %208, %207 : vector<8x128xf32>
    %210 = arith.divf %208, %209 : vector<8x128xf32>
    %211 = vector.extract_strided_slice %204 {offsets = [0, 128], sizes = [8, 128], strides = [1, 1]} : vector<8x512xf32> to vector<8x128xf32>
    %212 = arith.negf %211 : vector<8x128xf32>
    %213 = math.exp %212 : vector<8x128xf32>
    %cst_57 = arith.constant 1.000000e+00 : f32
    %214 = vector.broadcast %cst_57 : f32 to vector<8x128xf32>
    %215 = arith.addf %214, %213 : vector<8x128xf32>
    %216 = arith.divf %214, %215 : vector<8x128xf32>
    %217 = vector.extract_strided_slice %204 {offsets = [0, 256], sizes = [8, 128], strides = [1, 1]} : vector<8x512xf32> to vector<8x128xf32>
    %218 = math.tanh %217 : vector<8x128xf32>
    %219 = vector.extract_strided_slice %204 {offsets = [0, 384], sizes = [8, 128], strides = [1, 1]} : vector<8x512xf32> to vector<8x128xf32>
    %220 = arith.negf %219 : vector<8x128xf32>
    %221 = math.exp %220 : vector<8x128xf32>
    %cst_58 = arith.constant 1.000000e+00 : f32
    %222 = vector.broadcast %cst_58 : f32 to vector<8x128xf32>
    %223 = arith.addf %222, %221 : vector<8x128xf32>
    %224 = arith.divf %222, %223 : vector<8x128xf32>
    %225 = arith.mulf %216, %198 : vector<8x128xf32>
    %226 = arith.mulf %210, %218 : vector<8x128xf32>
    %227 = arith.addf %225, %226 : vector<8x128xf32>
    %228 = math.tanh %227 : vector<8x128xf32>
    %229 = arith.mulf %224, %228 : vector<8x128xf32>
    %c0_59 = arith.constant 0 : index
    %c0_60 = arith.constant 0 : index
    %230 = vector.load %arg5[%c0_59, %c0_60] : memref<1x128xf32, #tpu.memory_space<vmem>>, vector<1x128xf32>
    %231 = vector.broadcast %230 : vector<1x128xf32> to vector<8x128xf32>
    %232 = arith.mulf %229, %231 : vector<8x128xf32>
    %cst_61 = arith.constant dense<0.000000e+00> : vector<8xf32>
    %233 = vector.multi_reduction <add>, %232, %cst_61 [1] : vector<8x128xf32> to vector<8xf32>
    %234 = vector.shape_cast %233 : vector<8xf32> to vector<8x1xf32>
    %c0_62 = arith.constant 0 : index
    %c0_63 = arith.constant 0 : index
    %235 = vector.load %arg6[%c0_62, %c0_63] : memref<1x1xf32, #tpu.memory_space<vmem>>, vector<1x1xf32>
    %236 = vector.broadcast %235 : vector<1x1xf32> to vector<8x1xf32>
    %237 = arith.addf %234, %236 : vector<8x1xf32>
    %c0_64 = arith.constant 0 : index
    %c0_65 = arith.constant 0 : index
    %238 = vector.load %arg7[%c0_64, %c0_65] : memref<8x1xf32, #tpu.memory_space<vmem>>, vector<8x1xf32>
    tpu.vector_store %arg7[%c0_64, %c0_65], %237 {strides = array<i32>} : memref<8x1xf32, #tpu.memory_space<vmem>>, vector<8x1xf32>,
    return
  }
  func.func @transform_0(%arg0: i32) -> (i32, i32) {
    %c0_i32 = arith.constant 0 : i32
    %c0_i32_0 = arith.constant 0 : i32
    %c0_i32_1 = arith.constant 0 : i32
    return %c0_i32, %c0_i32_0 : i32, i32
  }
  func.func @transform_1(%arg0: i32) -> (i32, i32) {
    %c0_i32 = arith.constant 0 : i32
    %c0_i32_0 = arith.constant 0 : i32
    %c0_i32_1 = arith.constant 0 : i32
    return %c0_i32, %c0_i32_0 : i32, i32
  }
  func.func @transform_2(%arg0: i32) -> (i32, i32) {
    %c0_i32 = arith.constant 0 : i32
    %c0_i32_0 = arith.constant 0 : i32
    %c0_i32_1 = arith.constant 0 : i32
    return %c0_i32, %c0_i32_0 : i32, i32
  }
  func.func @transform_3(%arg0: i32) -> (i32, i32) {
    %c0_i32 = arith.constant 0 : i32
    %c0_i32_0 = arith.constant 0 : i32
    %c0_i32_1 = arith.constant 0 : i32
    return %c0_i32, %c0_i32_0 : i32, i32
  }
  func.func @transform_4(%arg0: i32) -> (i32, i32) {
    %c0_i32 = arith.constant 0 : i32
    %c0_i32_0 = arith.constant 0 : i32
    %c0_i32_1 = arith.constant 0 : i32
    return %c0_i32, %c0_i32_0 : i32, i32
  }
  func.func @transform_5(%arg0: i32) -> (i32, i32) {
    %c0_i32 = arith.constant 0 : i32
    %c0_i32_0 = arith.constant 0 : i32
    %c0_i32_1 = arith.constant 0 : i32
    return %c0_i32, %c0_i32_0 : i32, i32
  }
  func.func @transform_6(%arg0: i32) -> (i32, i32) {
    %c0_i32 = arith.constant 0 : i32
    %c0_i32_0 = arith.constant 0 : i32
    %c0_i32_1 = arith.constant 0 : i32
    return %c0_i32, %c0_i32_0 : i32, i32
  }
}

</mosaic_0001>

<llo_original>
// kernel: rainfall_lstm_forward.1
$region0: #{rainfall_lstm_forward.1}
  #allocation0 [shape = 'u32[]', space=smem, size = 0x4, offset = 0x4, fixed_abs, tag = 'smem constant byte address 0x4 - core index']
  #allocation1 [shape = 'u32[72,128]{1,0:T(1,128)}', space=vmem, size = 0x9000, scoped, tag = 'internal scratch']
  #allocation2 [shape = 'f32[64,512]{1,0:T(8,128)}', space=vmem, size = 0x20000, scoped, tag = 'scratch operand']
  #allocation3 [shape = 'f32[1,1]{1,0:T(1,128)S(1)}', space=vmem, size = 0x200, scoped, tag = 'scoped memory for rainfall_lstm_forward.1']
  %s0 = inlined_call_operand.vmem [shape: f32[64,1], index: 0, kind: input, shape index: {}]
  %s1 = inlined_call_operand.vmem [shape: f32[1,512], index: 1, kind: input, shape index: {}]
  %s2 = inlined_call_operand.hbm [shape: f32[128,512], index: 2, kind: input, shape index: {}]
  %s3 = inlined_call_operand.vmem [shape: f32[1,512], index: 3, kind: input, shape index: {}]
  %s4 = inlined_call_operand.vmem [shape: f32[1,128], index: 4, kind: input, shape index: {}]
  %s5 = inlined_call_operand.<no memory space> [shape: f32[1,1], index: 5, kind: input, shape index: {}]
  %s6 = inlined_call_operand.vmem [shape: f32[8,1], index: 6, kind: output, shape index: {}]
  %s7 = sld [smem:[#allocation0]]
  $region38: #{rainfall_lstm_forward.1} parent=0
    _
  %s9 = ssub.s32 1, %s7
  %s10 = scalar_select 0, %s9, %s7
  %v11 = vstv %s5
  %12 = vst [vmem:[#allocation3] sm:$0x1] %v11
  $region1: #{rainfall_lstm_forward.1} parent=0
    #allocation4 [shape = 'u8[262144]{0}', space=vmem, size = 0x40000, scoped, tag = 'input window, operand 2, single buffered']
    #allocation5 [shape = 's32[1]{0}', space=sflag, size = 0x4, scoped, tag = 'scoped memory for rainfall_lstm_forward.1']
    %13 = vsyncpa [#allocation5], 0
    // Predicated region
    $region2: #{rainfall_lstm_forward.1} parent=1 // pred_check
      _
    $region3: #{rainfall_lstm_forward.1} parent=1 // pred_check_branch
      %15 = sbr.rel (0) target = $region5
    $region4: #{rainfall_lstm_forward.1} parent=1 // pred_region
      _
    $region5: #{rainfall_lstm_forward.1} parent=1 // pred_fallthru
      _
    // Predicated region
    $region6: #{rainfall_lstm_forward.1} parent=1 // pred_check
      _
    $region7: #{rainfall_lstm_forward.1} parent=1 // pred_check_branch
      %17 = sbr.rel (0) target = $region9
    $region8: #{rainfall_lstm_forward.1} parent=1 // pred_region
      _
    $region9: #{rainfall_lstm_forward.1} parent=1 // pred_fallthru
      _
    // Predicated region
    $region10: #{rainfall_lstm_forward.1} parent=1 // pred_check
      _
    $region11: #{rainfall_lstm_forward.1} parent=1 // pred_check_branch
      %19 = sbr.rel (0) target = $region13
    $region12: #{rainfall_lstm_forward.1} parent=1 // pred_region
      %21 = vsyncadd [#allocation5], 0
      %s22 = sshll.u32 %s2, 4
      %s23 = int_to_ptr.hbm [resolvable:$true] %s22
      %s24 = sshll.u32 [#allocation4], 4
      %s25 = int_to_ptr.vmem [resolvable:$true] %s24
      %30 = dma.hbm_to_vmem [thread:$0]  %s23, 8192, %s25, [#allocation5], 512, 512, 32
    $region13: #{rainfall_lstm_forward.1} parent=1 // pred_fallthru
      _
    // Predicated region
    $region14: #{rainfall_lstm_forward.1} parent=1 // pred_check
      _
    $region15: #{rainfall_lstm_forward.1} parent=1 // pred_check_branch
      %32 = sbr.rel (0) target = $region17
    $region16: #{rainfall_lstm_forward.1} parent=1 // pred_region
      _
    $region17: #{rainfall_lstm_forward.1} parent=1 // pred_fallthru
      _
    // Predicated region
    $region18: #{rainfall_lstm_forward.1} parent=1 // pred_check
      _
    $region19: #{rainfall_lstm_forward.1} parent=1 // pred_check_branch
      %34 = sbr.rel (0) target = $region21
    $region20: #{rainfall_lstm_forward.1} parent=1 // pred_region
      _
    $region21: #{rainfall_lstm_forward.1} parent=1 // pred_fallthru
      _
    // Predicated region
    $region22: #{rainfall_lstm_forward.1} parent=1 // pred_check
      _
    $region23: #{rainfall_lstm_forward.1} parent=1 // pred_check_branch
      %36 = sbr.rel (0) target = $region25
    $region24: #{rainfall_lstm_forward.1} parent=1 // pred_region
      _
    $region25: #{rainfall_lstm_forward.1} parent=1 // pred_fallthru
      _
    // Predicated region
    $region26: #{rainfall_lstm_forward.1} parent=1 // pred_check
      _
    $region27: #{rainfall_lstm_forward.1} parent=1 // pred_check_branch
      %38 = sbr.rel (0) target = $region29
    $region28: #{rainfall_lstm_forward.1} parent=1 // pred_region
      %40 = dma.done [#allocation5], 8192
    $region29: #{rainfall_lstm_forward.1} parent=1 // pred_fallthru
      _
    %v41 = vld [vmem:[%s0] sm:$0xff]
    %v42 = vld [vmem:[%s0 + $0x8] sm:$0xff]
    %v43 = vld [vmem:[%s0 + $0x10] sm:$0xff]
    %v44 = vld [vmem:[%s0 + $0x18] sm:$0xff]
    %v45 = vld [vmem:[%s0 + $0x20] sm:$0xff]
    %v46 = vld [vmem:[%s0 + $0x28] sm:$0xff]
    %v47 = vld [vmem:[%s0 + $0x30] sm:$0xff]
    %v48 = vld [vmem:[%s0 + $0x38] sm:$0xff]
    %v49 = vld [vmem:[%s1] sm:$0xf]
    %51 = vset.pattern.permute.xlu0 0
    %52 = vperm.xlu0 %51, %v41
    %v53 = vpop.permute.xlu0 %52
    %56 = vset.pattern.permute.xlu0 0
    %57 = vperm.xlu0 %56, %v42
    %v58 = vpop.permute.xlu0 %57
    %61 = vset.pattern.permute.xlu0 0
    %62 = vperm.xlu0 %61, %v43
    %v63 = vpop.permute.xlu0 %62
    %66 = vset.pattern.permute.xlu0 0
    %67 = vperm.xlu0 %66, %v44
    %v68 = vpop.permute.xlu0 %67
    %71 = vset.pattern.permute.xlu0 0
    %72 = vperm.xlu0 %71, %v45
    %v73 = vpop.permute.xlu0 %72
    %76 = vset.pattern.permute.xlu0 0
    %77 = vperm.xlu0 %76, %v46
    %v78 = vpop.permute.xlu0 %77
    %81 = vset.pattern.permute.xlu0 0
    %82 = vperm.xlu0 %81, %v47
    %v83 = vpop.permute.xlu0 %82
    %86 = vset.pattern.permute.xlu0 0
    %87 = vperm.xlu0 %86, %v48
    %v88 = vpop.permute.xlu0 %87
    %v91 = vperm.slane %v49, 0
    %v92 = vperm.slane %v49, 1
    %v93 = vperm.slane %v49, 2
    %v94 = vperm.slane %v49, 3
    %v99 = vmul.f32 %v53, %v91
    %v100 = vmul.f32 %v53, %v92
    %v101 = vmul.f32 %v53, %v93
    %v102 = vmul.f32 %v53, %v94
    %v103 = vmul.f32 %v58, %v91
    %v104 = vmul.f32 %v58, %v92
    %v105 = vmul.f32 %v58, %v93
    %v106 = vmul.f32 %v58, %v94
    %v107 = vmul.f32 %v63, %v91
    %v108 = vmul.f32 %v63, %v92
    %v109 = vmul.f32 %v63, %v93
    %v110 = vmul.f32 %v63, %v94
    %v111 = vmul.f32 %v68, %v91
    %v112 = vmul.f32 %v68, %v92
    %v113 = vmul.f32 %v68, %v93
    %v114 = vmul.f32 %v68, %v94
    %v115 = vmul.f32 %v73, %v91
    %v116 = vmul.f32 %v73, %v92
    %v117 = vmul.f32 %v73, %v93
    %v118 = vmul.f32 %v73, %v94
    %v119 = vmul.f32 %v78, %v91
    %v120 = vmul.f32 %v78, %v92
    %v121 = vmul.f32 %v78, %v93
    %v122 = vmul.f32 %v78, %v94
    %v123 = vmul.f32 %v83, %v91
    %v124 = vmul.f32 %v83, %v92
    %v125 = vmul.f32 %v83, %v93
    %v126 = vmul.f32 %v83, %v94
    %v127 = vmul.f32 %v88, %v91
    %v128 = vmul.f32 %v88, %v92
    %v129 = vmul.f32 %v88, %v93
    %v130 = vmul.f32 %v88, %v94
    %v131 = vld [vmem:[%s3] sm:$0xf]
    %v133 = vperm.slane %v131, 0
    %v134 = vperm.slane %v131, 1
    %v135 = vperm.slane %v131, 2
    %v136 = vperm.slane %v131, 3
    %v141 = vadd.f32 %v99, %v133
    %v142 = vadd.f32 %v100, %v134
    %v143 = vadd.f32 %v101, %v135
    %v144 = vadd.f32 %v102, %v136
    %v145 = vadd.f32 %v103, %v133
    %v146 = vadd.f32 %v104, %v134
    %v147 = vadd.f32 %v105, %v135
    %v148 = vadd.f32 %v106, %v136
    %v149 = vadd.f32 %v107, %v133
    %v150 = vadd.f32 %v108, %v134
    %v151 = vadd.f32 %v109, %v135
    %v152 = vadd.f32 %v110, %v136
    %v153 = vadd.f32 %v111, %v133
    %v154 = vadd.f32 %v112, %v134
    %v155 = vadd.f32 %v113, %v135
    %v156 = vadd.f32 %v114, %v136
    %v157 = vadd.f32 %v115, %v133
    %v158 = vadd.f32 %v116, %v134
    %v159 = vadd.f32 %v117, %v135
    %v160 = vadd.f32 %v118, %v136
    %v161 = vadd.f32 %v119, %v133
    %v162 = vadd.f32 %v120, %v134
    %v163 = vadd.f32 %v121, %v135
    %v164 = vadd.f32 %v122, %v136
    %v165 = vadd.f32 %v123, %v133
    %v166 = vadd.f32 %v124, %v134
    %v167 = vadd.f32 %v125, %v135
    %v168 = vadd.f32 %v126, %v136
    %v169 = vadd.f32 %v127, %v133
    %v170 = vadd.f32 %v128, %v134
    %v171 = vadd.f32 %v129, %v135
    %v172 = vadd.f32 %v130, %v136
    %173 = vst [vmem:[#allocation2] sm:$0xff] %v141
    %174 = vst [vmem:[#allocation2 + $0x8] sm:$0xff] %v142
    %175 = vst [vmem:[#allocation2 + $0x10] sm:$0xff] %v143
    %176 = vst [vmem:[#allocation2 + $0x18] sm:$0xff] %v144
    %177 = vst [vmem:[#allocation2 + $0x20] sm:$0xff] %v145
    %178 = vst [vmem:[#allocation2 + $0x28] sm:$0xff] %v146
    %179 = vst [vmem:[#allocation2 + $0x30] sm:$0xff] %v147
    %180 = vst [vmem:[#allocation2 + $0x38] sm:$0xff] %v148
    %181 = vst [vmem:[#allocation2 + $0x40] sm:$0xff] %v149
    %182 = vst [vmem:[#allocation2 + $0x48] sm:$0xff] %v150
    %183 = vst [vmem:[#allocation2 + $0x50] sm:$0xff] %v151
    %184 = vst [vmem:[#allocation2 + $0x58] sm:$0xff] %v152
    %185 = vst [vmem:[#allocation2 + $0x60] sm:$0xff] %v153
    %186 = vst [vmem:[#allocation2 + $0x68] sm:$0xff] %v154
    %187 = vst [vmem:[#allocation2 + $0x70] sm:$0xff] %v155
    %188 = vst [vmem:[#allocation2 + $0x78] sm:$0xff] %v156
    %189 = vst [vmem:[#allocation2 + $0x80] sm:$0xff] %v157
    %190 = vst [vmem:[#allocation2 + $0x88] sm:$0xff] %v158
    %191 = vst [vmem:[#allocation2 + $0x90] sm:$0xff] %v159
    %192 = vst [vmem:[#allocation2 + $0x98] sm:$0xff] %v160
    %193 = vst [vmem:[#allocation2 + $0xa0] sm:$0xff] %v161
    %194 = vst [vmem:[#allocation2 + $0xa8] sm:$0xff] %v162
    %195 = vst [vmem:[#allocation2 + $0xb0] sm:$0xff] %v163
    %196 = vst [vmem:[#allocation2 + $0xb8] sm:$0xff] %v164
    %197 = vst [vmem:[#allocation2 + $0xc0] sm:$0xff] %v165
    %198 = vst [vmem:[#allocation2 + $0xc8] sm:$0xff] %v166
    %199 = vst [vmem:[#allocation2 + $0xd0] sm:$0xff] %v167
    %200 = vst [vmem:[#allocation2 + $0xd8] sm:$0xff] %v168
    %201 = vst [vmem:[#allocation2 + $0xe0] sm:$0xff] %v169
    %202 = vst [vmem:[#allocation2 + $0xe8] sm:$0xff] %v170
    %203 = vst [vmem:[#allocation2 + $0xf0] sm:$0xff] %v171
    %204 = vst [vmem:[#allocation2 + $0xf8] sm:$0xff] %v172
    %v205 = vld [vmem:[#allocation2] sm:$0xff]
    %v206 = vld [vmem:[#allocation2 + $0x10] sm:$0xff]
    %v207 = vld [vmem:[#allocation2 + $0x18] sm:$0xff]
    %v208 = vxor.u32 %v205, 2147483648
    %v209 = vmul.f32 %v208, 1.442695
    %v210 = vpow.pop %v209
    %v211 = vadd.f32 %v210, 1.0
    %v212 = vrcp.pop %v211
    %v213 = vmul.f32 %v211, %v212
    %v214 = vsub.f32 1.0, %v213
    %v215 = vmul.f32 %v212, %v214
    %v216 = vadd.f32 %v212, %v215
    %vm217 = vweird.f32 %v211
    %vm218 = vweird.f32 %v212
    %vm219 = vmor %vm217, %vm218
    %v220 = vsel %vm219, %v212, %v216
    %v221 = vand.u32 2147483647, %v211
    %vm222 = vcmp.eq.f32.partialorder %v221, 8.507059e+37
    %v223 = vand.u32 %v211, 2147483648
    %v224 = vor.u32 1.1754944e-38, %v223
    %v225 = vsel %vm222, %v224, %v220
    %v226 = vmul.f32 1.0, %v225
    %v227 = vtanh.pop %v206
    %v228 = vxor.u32 %v207, 2147483648
    %v229 = vmul.f32 %v228, 1.442695
    %v230 = vpow.pop %v229
    %v231 = vadd.f32 %v230, 1.0
    %v232 = vrcp.pop %v231
    %v233 = vmul.f32 %v231, %v232
    %v234 = vsub.f32 1.0, %v233
    %v235 = vmul.f32 %v232, %v234
    %v236 = vadd.f32 %v232, %v235
    %vm237 = vweird.f32 %v231
    %vm238 = vweird.f32 %v232
    %vm239 = vmor %vm237, %vm238
    %v240 = vsel %vm239, %v232, %v236
    %v241 = vand.u32 2147483647, %v231
    %vm242 = vcmp.eq.f32.partialorder %v241, 8.507059e+37
    %v243 = vand.u32 %v231, 2147483648
    %v244 = vor.u32 1.1754944e-38, %v243
    %v245 = vsel %vm242, %v244, %v240
    %v246 = vmul.f32 1.0, %v245
    %v247 = vmul.f32 %v226, %v227
    %v248 = vtanh.pop %v247
    %v249 = vmul.f32 %v246, %v248
    %v250 = vld [vmem:[#allocation2 + $0x20] sm:$0xff]
    %v251 = vld [vmem:[#allocation2 + $0x28] sm:$0xff]
    %v252 = vld [vmem:[#allocation2 + $0x30] sm:$0xff]
    %v253 = vld [vmem:[#allocation2 + $0x38] sm:$0xff]
    %v254 = vld [vmem:[#allocation4] sm:$0xff]
    %v255 = vld [vmem:[#allocation4 + $0x8] sm:$0xff]
    %v256 = vld [vmem:[#allocation4 + $0x10] sm:$0xff]
    %v257 = vld [vmem:[#allocation4 + $0x18] sm:$0xff]
    %v258 = vld [vmem:[#allocation4 + $0x20] sm:$0xff]
    %v259 = vld [vmem:[#allocation4 + $0x28] sm:$0xff]
    %v260 = vld [vmem:[#allocation4 + $0x30] sm:$0xff]
    %v261 = vld [vmem:[#allocation4 + $0x38] sm:$0xff]
    %v262 = vld [vmem:[#allocation4 + $0x40] sm:$0xff]
    %v263 = vld [vmem:[#allocation4 + $0x48] sm:$0xff]
    %v264 = vld [vmem:[#allocation4 + $0x50] sm:$0xff]
    %v265 = vld [vmem:[#allocation4 + $0x58] sm:$0xff]
    %v266 = vld [vmem:[#allocation4 + $0x60] sm:$0xff]
    %v267 = vld [vmem:[#allocation4 + $0x68] sm:$0xff]
    %v268 = vld [vmem:[#allocation4 + $0x70] sm:$0xff]
    %v269 = vld [vmem:[#allocation4 + $0x78] sm:$0xff]
    %v270 = vld [vmem:[#allocation4 + $0x80] sm:$0xff]
    %v271 = vld [vmem:[#allocation4 + $0x88] sm:$0xff]
    %v272 = vld [vmem:[#allocation4 + $0x90] sm:$0xff]
    %v273 = vld [vmem:[#allocation4 + $0x98] sm:$0xff]
    %v274 = vld [vmem:[#allocation4 + $0xa0] sm:$0xff]
    %v275 = vld [vmem:[#allocation4 + $0xa8] sm:$0xff]
    %v276 = vld [vmem:[#allocation4 + $0xb0] sm:$0xff]
    %v277 = vld [vmem:[#allocation4 + $0xb8] sm:$0xff]
    %v278 = vld [vmem:[#allocation4 + $0xc0] sm:$0xff]
    %v279 = vld [vmem:[#allocation4 + $0xc8] sm:$0xff]
    %v280 = vld [vmem:[#allocation4 + $0xd0] sm:$0xff]
    %v281 = vld [vmem:[#allocation4 + $0xd8] sm:$0xff]
    %v282 = vld [vmem:[#allocation4 + $0xe0] sm:$0xff]
    %v283 = vld [vmem:[#allocation4 + $0xe8] sm:$0xff]
    %v284 = vld [vmem:[#allocation4 + $0xf0] sm:$0xff]
    %v285 = vld [vmem:[#allocation4 + $0xf8] sm:$0xff]
    %v286 = vld [vmem:[#allocation4 + $0x100] sm:$0xff]
    %v287 = vld [vmem:[#allocation4 + $0x108] sm:$0xff]
    %v288 = vld [vmem:[#allocation4 + $0x110] sm:$0xff]
    %v289 = vld [vmem:[#allocation4 + $0x118] sm:$0xff]
    %v290 = vld [vmem:[#allocation4 + $0x120] sm:$0xff]
    %v291 = vld [vmem:[#allocation4 + $0x128] sm:$0xff]
    %v292 = vld [vmem:[#allocation4 + $0x130] sm:$0xff]
    %v293 = vld [vmem:[#allocation4 + $0x138] sm:$0xff]
    %v294 = vld [vmem:[#allocation4 + $0x140] sm:$0xff]
    %v295 = vld [vmem:[#allocation4 + $0x148] sm:$0xff]
    %v296 = vld [vmem:[#allocation4 + $0x150] sm:$0xff]
    %v297 = vld [vmem:[#allocation4 + $0x158] sm:$0xff]
    %v298 = vld [vmem:[#allocation4 + $0x160] sm:$0xff]
    %v299 = vld [vmem:[#allocation4 + $0x168] sm:$0xff]
    %v300 = vld [vmem:[#allocation4 + $0x170] sm:$0xff]
    %v301 = vld [vmem:[#allocation4 + $0x178] sm:$0xff]
    %v302 = vld [vmem:[#allocation4 + $0x180] sm:$0xff]
    %v303 = vld [vmem:[#allocation4 + $0x188] sm:$0xff]
    %v304 = vld [vmem:[#allocation4 + $0x190] sm:$0xff]
    %v305 = vld [vmem:[#allocation4 + $0x198] sm:$0xff]
    %v306 = vld [vmem:[#allocation4 + $0x1a0] sm:$0xff]
    %v307 = vld [vmem:[#allocation4 + $0x1a8] sm:$0xff]
    %v308 = vld [vmem:[#allocation4 + $0x1b0] sm:$0xff]
    %v309 = vld [vmem:[#allocation4 + $0x1b8] sm:$0xff]
    %v310 = vld [vmem:[#allocation4 + $0x1c0] sm:$0xff]
    %v311 = vld [vmem:[#allocation4 + $0x1c8] sm:$0xff]
    %v312 = vld [vmem:[#allocation4 + $0x1d0] sm:$0xff]
    %v313 = vld [vmem:[#allocation4 + $0x1d8] sm:$0xff]
    %v314 = vld [vmem:[#allocation4 + $0x1e0] sm:$0xff]
    %v315 = vld [vmem:[#allocation4 + $0x1e8] sm:$0xff]
    %v316 = vld [vmem:[#allocation4 + $0x1f0] sm:$0xff]
    %v317 = vld [vmem:[#allocation4 + $0x1f8] sm:$0xff]
    %318 = vmatpush.msra.mxu0 %v314
    %319 = vmatpush.msra.mxu0 %v310
    %320 = vmatpush.msra.mxu0 %v306
    %321 = vmatpush.msra.mxu0 %v302
    %322 = vmatpush.msra.mxu0 %v298
    %323 = vmatpush.msra.mxu0 %v294
    %324 = vmatpush.msra.mxu0 %v290
    %325 = vmatpush.msra.mxu0 %v286
    %326 = vmatpush.msra.mxu0 %v282
    %327 = vmatpush.msra.mxu0 %v278
    %328 = vmatpush.msra.mxu0 %v274
    %329 = vmatpush.msra.mxu0 %v270
    %330 = vmatpush.msra.mxu0 %v266
    %331 = vmatpush.msra.mxu0 %v262
    %332 = vmatpush.msra.mxu0 %v258
    %333 = vmatpush.msra.mxu0 %v254
    %334 = vmatmul.f32.gmra.mxu0 %v249
    %v335 = vpop.f32.mrf.mxu0
    %v336 = vadd.f32 0.0, %v335
    %337 = vdwg.mxu0
    %338 = vmatpush.msra.mxu0 %v315
    %339 = vmatpush.msra.mxu0 %v311
    %340 = vmatpush.msra.mxu0 %v307
    %341 = vmatpush.msra.mxu0 %v303
    %342 = vmatpush.msra.mxu0 %v299
    %343 = vmatpush.msra.mxu0 %v295
    %344 = vmatpush.msra.mxu0 %v291
    %345 = vmatpush.msra.mxu0 %v287
    %346 = vmatpush.msra.mxu0 %v283
    %347 = vmatpush.msra.mxu0 %v279
    %348 = vmatpush.msra.mxu0 %v275
    %349 = vmatpush.msra.mxu0 %v271
    %350 = vmatpush.msra.mxu0 %v267
    %351 = vmatpush.msra.mxu0 %v263
    %352 = vmatpush.msra.mxu0 %v259
    %353 = vmatpush.msra.mxu0 %v255
    %354 = vmatmul.f32.gmra.mxu0 %v249
    %v355 = vpop.f32.mrf.mxu0
    %v356 = vadd.f32 0.0, %v355
    %357 = vdwg.mxu0
    %358 = vmatpush.msra.mxu0 %v316
    %359 = vmatpush.msra.mxu0 %v312
    %360 = vmatpush.msra.mxu0 %v308
    %361 = vmatpush.msra.mxu0 %v304
    %362 = vmatpush.msra.mxu0 %v300
    %363 = vmatpush.msra.mxu0 %v296
    %364 = vmatpush.msra.mxu0 %v292
    %365 = vmatpush.msra.mxu0 %v288
    %366 = vmatpush.msra.mxu0 %v284
    %367 = vmatpush.msra.mxu0 %v280
    %368 = vmatpush.msra.mxu0 %v276
    %369 = vmatpush.msra.mxu0 %v272
    %370 = vmatpush.msra.mxu0 %v268
    %371 = vmatpush.msra.mxu0 %v264
    %372 = vmatpush.msra.mxu0 %v260
    %373 = vmatpush.msra.mxu0 %v256
    %374 = vmatmul.f32.gmra.mxu0 %v249
    %v375 = vpop.f32.mrf.mxu0
    %v376 = vadd.f32 0.0, %v375
    %377 = vdwg.mxu0
    %378 = vmatpush.msra.mxu0 %v317
    %379 = vmatpush.msra.mxu0 %v313
    %380 = vmatpush.msra.mxu0 %v309
    %381 = vmatpush.msra.mxu0 %v305
    %382 = vmatpush.msra.mxu0 %v301
    %383 = vmatpush.msra.mxu0 %v297
    %384 = vmatpush.msra.mxu0 %v293
    %385 = vmatpush.msra.mxu0 %v289
    %386 = vmatpush.msra.mxu0 %v285
    %387 = vmatpush.msra.mxu0 %v281
    %388 = vmatpush.msra.mxu0 %v277
    %389 = vmatpush.msra.mxu0 %v273
    %390 = vmatpush.msra.mxu0 %v269
    %391 = vmatpush.msra.mxu0 %v265
    %392 = vmatpush.msra.mxu0 %v261
    %393 = vmatpush.msra.mxu0 %v257
    %394 = vmatmul.f32.gmra.mxu0 %v249
    %v395 = vpop.f32.mrf.mxu0
    %v396 = vadd.f32 0.0, %v395
    %397 = vdwg.mxu0
    %v398 = vadd.f32 %v250, %v336
    %v399 = vadd.f32 %v251, %v356
    %v400 = vadd.f32 %v252, %v376
    %v401 = vadd.f32 %v253, %v396
    %v402 = vxor.u32 %v398, 2147483648
    %v403 = vmul.f32 %v402, 1.442695
    %v404 = vpow.pop %v403
    %v405 = vadd.f32 %v404, 1.0
    %v406 = vrcp.pop %v405
    %v407 = vmul.f32 %v405, %v406
    %v408 = vsub.f32 1.0, %v407
    %v409 = vmul.f32 %v406, %v408
    %v410 = vadd.f32 %v406, %v409
    %vm411 = vweird.f32 %v405
    %vm412 = vweird.f32 %v406
    %vm413 = vmor %vm411, %vm412
    %v414 = vsel %vm413, %v406, %v410
    %v415 = vand.u32 2147483647, %v405
    %vm416 = vcmp.eq.f32.partialorder %v415, 8.507059e+37
    %v417 = vand.u32 %v405, 2147483648
    %v418 = vor.u32 1.1754944e-38, %v417
    %v419 = vsel %vm416, %v418, %v414
    %v420 = vmul.f32 1.0, %v419
    %v421 = vxor.u32 %v399, 2147483648
    %v422 = vmul.f32 %v421, 1.442695
    %v423 = vpow.pop %v422
    %v424 = vadd.f32 %v423, 1.0
    %v425 = vrcp.pop %v424
    %v426 = vmul.f32 %v424, %v425
    %v427 = vsub.f32 1.0, %v426
    %v428 = vmul.f32 %v425, %v427
    %v429 = vadd.f32 %v425, %v428
    %vm430 = vweird.f32 %v424
    %vm431 = vweird.f32 %v425
    %vm432 = vmor %vm430, %vm431
    %v433 = vsel %vm432, %v425, %v429
    %v434 = vand.u32 2147483647, %v424
    %vm435 = vcmp.eq.f32.partialorder %v434, 8.507059e+37
    %v436 = vand.u32 %v424, 2147483648
    %v437 = vor.u32 1.1754944e-38, %v436
    %v438 = vsel %vm435, %v437, %v433
    %v439 = vmul.f32 1.0, %v438
    %v440 = vtanh.pop %v400
    %v441 = vxor.u32 %v401, 2147483648
    %v442 = vmul.f32 %v441, 1.442695
    %v443 = vpow.pop %v442
    %v444 = vadd.f32 %v443, 1.0
    %v445 = vrcp.pop %v444
    %v446 = vmul.f32 %v444, %v445
    %v447 = vsub.f32 1.0, %v446
    %v448 = vmul.f32 %v445, %v447
    %v449 = vadd.f32 %v445, %v448
    %vm450 = vweird.f32 %v444
    %vm451 = vweird.f32 %v445
    %vm452 = vmor %vm450, %vm451
    %v453 = vsel %vm452, %v445, %v449
    %v454 = vand.u32 2147483647, %v444
    %vm455 = vcmp.eq.f32.partialorder %v454, 8.507059e+37
    %v456 = vand.u32 %v444, 2147483648
    %v457 = vor.u32 1.1754944e-38, %v456
    %v458 = vsel %vm455, %v457, %v453
    %v459 = vmul.f32 1.0, %v458
    %v460 = vmul.f32 %v439, %v247
    %v461 = vmul.f32 %v420, %v440
    %v462 = vadd.f32 %v460, %v461
    %v463 = vtanh.pop %v462
    %v464 = vmul.f32 %v459, %v463
    %v465 = vld [vmem:[#allocation2 + $0x40] sm:$0xff]
    %v466 = vld [vmem:[#allocation2 + $0x48] sm:$0xff]
    %v467 = vld [vmem:[#allocation2 + $0x50] sm:$0xff]
    %v468 = vld [vmem:[#allocation2 + $0x58] sm:$0xff]
    %469 = vmatpush.msra.mxu0 %v314
    %470 = vmatpush.msra.mxu0 %v310
    %471 = vmatpush.msra.mxu0 %v306
    %472 = vmatpush.msra.mxu0 %v302
    %473 = vmatpush.msra.mxu0 %v298
    %474 = vmatpush.msra.mxu0 %v294
    %475 = vmatpush.msra.mxu0 %v290
    %476 = vmatpush.msra.mxu0 %v286
    %477 = vmatpush.msra.mxu0 %v282
    %478 = vmatpush.msra.mxu0 %v278
    %479 = vmatpush.msra.mxu0 %v274
    %480 = vmatpush.msra.mxu0 %v270
    %481 = vmatpush.msra.mxu0 %v266
    %482 = vmatpush.msra.mxu0 %v262
    %483 = vmatpush.msra.mxu0 %v258
    %484 = vmatpush.msra.mxu0 %v254
    %485 = vmatmul.f32.gmra.mxu0 %v464
    %v486 = vpop.f32.mrf.mxu0
    %v487 = vadd.f32 0.0, %v486
    %488 = vdwg.mxu0
    %489 = vmatpush.msra.mxu0 %v315
    %490 = vmatpush.msra.mxu0 %v311
    %491 = vmatpush.msra.mxu0 %v307
    %492 = vmatpush.msra.mxu0 %v303
    %493 = vmatpush.msra.mxu0 %v299
    %494 = vmatpush.msra.mxu0 %v295
    %495 = vmatpush.msra.mxu0 %v291
    %496 = vmatpush.msra.mxu0 %v287
    %497 = vmatpush.msra.mxu0 %v283
    %498 = vmatpush.msra.mxu0 %v279
    %499 = vmatpush.msra.mxu0 %v275
    %500 = vmatpush.msra.mxu0 %v271
    %501 = vmatpush.msra.mxu0 %v267
    %502 = vmatpush.msra.mxu0 %v263
    %503 = vmatpush.msra.mxu0 %v259
    %504 = vmatpush.msra.mxu0 %v255
    %505 = vmatmul.f32.gmra.mxu0 %v464
    %v506 = vpop.f32.mrf.mxu0
    %v507 = vadd.f32 0.0, %v506
    %508 = vdwg.mxu0
    %509 = vmatpush.msra.mxu0 %v316
    %510 = vmatpush.msra.mxu0 %v312
    %511 = vmatpush.msra.mxu0 %v308
    %512 = vmatpush.msra.mxu0 %v304
    %513 = vmatpush.msra.mxu0 %v300
    %514 = vmatpush.msra.mxu0 %v296
    %515 = vmatpush.msra.mxu0 %v292
    %516 = vmatpush.msra.mxu0 %v288
    %517 = vmatpush.msra.mxu0 %v284
    %518 = vmatpush.msra.mxu0 %v280
    %519 = vmatpush.msra.mxu0 %v276
    %520 = vmatpush.msra.mxu0 %v272
    %521 = vmatpush.msra.mxu0 %v268
    %522 = vmatpush.msra.mxu0 %v264
    %523 = vmatpush.msra.mxu0 %v260
    %524 = vmatpush.msra.mxu0 %v256
    %525 = vmatmul.f32.gmra.mxu0 %v464
    %v526 = vpop.f32.mrf.mxu0
    %v527 = vadd.f32 0.0, %v526
    %528 = vdwg.mxu0
    %529 = vmatpush.msra.mxu0 %v317
    %530 = vmatpush.msra.mxu0 %v313
    %531 = vmatpush.msra.mxu0 %v309
    %532 = vmatpush.msra.mxu0 %v305
    %533 = vmatpush.msra.mxu0 %v301
    %534 = vmatpush.msra.mxu0 %v297
    %535 = vmatpush.msra.mxu0 %v293
    %536 = vmatpush.msra.mxu0 %v289
    %537 = vmatpush.msra.mxu0 %v285
    %538 = vmatpush.msra.mxu0 %v281
    %539 = vmatpush.msra.mxu0 %v277
    %540 = vmatpush.msra.mxu0 %v273
    %541 = vmatpush.msra.mxu0 %v269
    %542 = vmatpush.msra.mxu0 %v265
    %543 = vmatpush.msra.mxu0 %v261
    %544 = vmatpush.msra.mxu0 %v257
    %545 = vmatmul.f32.gmra.mxu0 %v464
    %v546 = vpop.f32.mrf.mxu0
    %v547 = vadd.f32 0.0, %v546
    %548 = vdwg.mxu0
    %v549 = vadd.f32 %v465, %v487
    %v550 = vadd.f32 %v466, %v507
    %v551 = vadd.f32 %v467, %v527
    %v552 = vadd.f32 %v468, %v547
    %v553 = vxor.u32 %v549, 2147483648
    %v554 = vmul.f32 %v553, 1.442695
    %v555 = vpow.pop %v554
    %v556 = vadd.f32 %v555, 1.0
    %v557 = vrcp.pop %v556
    %v558 = vmul.f32 %v556, %v557
    %v559 = vsub.f32 1.0, %v558
    %v560 = vmul.f32 %v557, %v559
    %v561 = vadd.f32 %v557, %v560
    %vm562 = vweird.f32 %v556
    %vm563 = vweird.f32 %v557
    %vm564 = vmor %vm562, %vm563
    %v565 = vsel %vm564, %v557, %v561
    %v566 = vand.u32 2147483647, %v556
    %vm567 = vcmp.eq.f32.partialorder %v566, 8.507059e+37
    %v568 = vand.u32 %v556, 2147483648
    %v569 = vor.u32 1.1754944e-38, %v568
    %v570 = vsel %vm567, %v569, %v565
    %v571 = vmul.f32 1.0, %v570
    %v572 = vxor.u32 %v550, 2147483648
    %v573 = vmul.f32 %v572, 1.442695
    %v574 = vpow.pop %v573
    %v575 = vadd.f32 %v574, 1.0
    %v576 = vrcp.pop %v575
    %v577 = vmul.f32 %v575, %v576
    %v578 = vsub.f32 1.0, %v577
    %v579 = vmul.f32 %v576, %v578
    %v580 = vadd.f32 %v576, %v579
    %vm581 = vweird.f32 %v575
    %vm582 = vweird.f32 %v576
    %vm583 = vmor %vm581, %vm582
    %v584 = vsel %vm583, %v576, %v580
    %v585 = vand.u32 2147483647, %v575
    %vm586 = vcmp.eq.f32.partialorder %v585, 8.507059e+37
    %v587 = vand.u32 %v575, 2147483648
    %v588 = vor.u32 1.1754944e-38, %v587
    %v589 = vsel %vm586, %v588, %v584
    %v590 = vmul.f32 1.0, %v589
    %v591 = vtanh.pop %v551
    %v592 = vxor.u32 %v552, 2147483648
    %v593 = vmul.f32 %v592, 1.442695
    %v594 = vpow.pop %v593
    %v595 = vadd.f32 %v594, 1.0
    %v596 = vrcp.pop %v595
    %v597 = vmul.f32 %v595, %v596
    %v598 = vsub.f32 1.0, %v597
    %v599 = vmul.f32 %v596, %v598
    %v600 = vadd.f32 %v596, %v599
    %vm601 = vweird.f32 %v595
    %vm602 = vweird.f32 %v596
    %vm603 = vmor %vm601, %vm602
    %v604 = vsel %vm603, %v596, %v600
    %v605 = vand.u32 2147483647, %v595
    %vm606 = vcmp.eq.f32.partialorder %v605, 8.507059e+37
    %v607 = vand.u32 %v595, 2147483648
    %v608 = vor.u32 1.1754944e-38, %v607
    %v609 = vsel %vm606, %v608, %v604
    %v610 = vmul.f32 1.0, %v609
    %v611 = vmul.f32 %v590, %v462
    %v612 = vmul.f32 %v571, %v591
    %v613 = vadd.f32 %v611, %v612
    %v614 = vtanh.pop %v613
    %v615 = vmul.f32 %v610, %v614
    %v616 = vld [vmem:[#allocation2 + $0x60] sm:$0xff]
    %v617 = vld [vmem:[#allocation2 + $0x68] sm:$0xff]
    %v618 = vld [vmem:[#allocation2 + $0x70] sm:$0xff]
    %v619 = vld [vmem:[#allocation2 + $0x78] sm:$0xff]
    %620 = vmatpush.msra.mxu0 %v314
    %621 = vmatpush.msra.mxu0 %v310
    %622 = vmatpush.msra.mxu0 %v306
    %623 = vmatpush.msra.mxu0 %v302
    %624 = vmatpush.msra.mxu0 %v298
    %625 = vmatpush.msra.mxu0 %v294
    %626 = vmatpush.msra.mxu0 %v290
    %627 = vmatpush.msra.mxu0 %v286
    %628 = vmatpush.msra.mxu0 %v282
    %629 = vmatpush.msra.mxu0 %v278
    %630 = vmatpush.msra.mxu0 %v274
    %631 = vmatpush.msra.mxu0 %v270
    %632 = vmatpush.msra.mxu0 %v266
    %633 = vmatpush.msra.mxu0 %v262
    %634 = vmatpush.msra.mxu0 %v258
    %635 = vmatpush.msra.mxu0 %v254
    %636 = vmatmul.f32.gmra.mxu0 %v615
    %v637 = vpop.f32.mrf.mxu0
    %v638 = vadd.f32 0.0, %v637
    %639 = vdwg.mxu0
    %640 = vmatpush.msra.mxu0 %v315
    %641 = vmatpush.msra.mxu0 %v311
    %642 = vmatpush.msra.mxu0 %v307
    %643 = vmatpush.msra.mxu0 %v303
    %644 = vmatpush.msra.mxu0 %v299
    %645 = vmatpush.msra.mxu0 %v295
    %646 = vmatpush.msra.mxu0 %v291
    %647 = vmatpush.msra.mxu0 %v287
    %648 = vmatpush.msra.mxu0 %v283
    %649 = vmatpush.msra.mxu0 %v279
    %650 = vmatpush.msra.mxu0 %v275
    %651 = vmatpush.msra.mxu0 %v271
    %652 = vmatpush.msra.mxu0 %v267
    %653 = vmatpush.msra.mxu0 %v263
    %654 = vmatpush.msra.mxu0 %v259
    %655 = vmatpush.msra.mxu0 %v255
    %656 = vmatmul.f32.gmra.mxu0 %v615
    %v657 = vpop.f32.mrf.mxu0
    %v658 = vadd.f32 0.0, %v657
    %659 = vdwg.mxu0
    %660 = vmatpush.msra.mxu0 %v316
    %661 = vmatpush.msra.mxu0 %v312
    %662 = vmatpush.msra.mxu0 %v308
    %663 = vmatpush.msra.mxu0 %v304
    %664 = vmatpush.msra.mxu0 %v300
    %665 = vmatpush.msra.mxu0 %v296
    %666 = vmatpush.msra.mxu0 %v292
    %667 = vmatpush.msra.mxu0 %v288
    %668 = vmatpush.msra.mxu0 %v284
    %669 = vmatpush.msra.mxu0 %v280
    %670 = vmatpush.msra.mxu0 %v276
    %671 = vmatpush.msra.mxu0 %v272
    %672 = vmatpush.msra.mxu0 %v268
    %673 = vmatpush.msra.mxu0 %v264
    %674 = vmatpush.msra.mxu0 %v260
    %675 = vmatpush.msra.mxu0 %v256
    %676 = vmatmul.f32.gmra.mxu0 %v615
    %v677 = vpop.f32.mrf.mxu0
    %v678 = vadd.f32 0.0, %v677
    %679 = vdwg.mxu0
    %680 = vmatpush.msra.mxu0 %v317
    %681 = vmatpush.msra.mxu0 %v313
    %682 = vmatpush.msra.mxu0 %v309
    %683 = vmatpush.msra.mxu0 %v305
    %684 = vmatpush.msra.mxu0 %v301
    %685 = vmatpush.msra.mxu0 %v297
    %686 = vmatpush.msra.mxu0 %v293
    %687 = vmatpush.msra.mxu0 %v289
    %688 = vmatpush.msra.mxu0 %v285
    %689 = vmatpush.msra.mxu0 %v281
    %690 = vmatpush.msra.mxu0 %v277
    %691 = vmatpush.msra.mxu0 %v273
    %692 = vmatpush.msra.mxu0 %v269
    %693 = vmatpush.msra.mxu0 %v265
    %694 = vmatpush.msra.mxu0 %v261
    %695 = vmatpush.msra.mxu0 %v257
    %696 = vmatmul.f32.gmra.mxu0 %v615
    %v697 = vpop.f32.mrf.mxu0
    %v698 = vadd.f32 0.0, %v697
    %699 = vdwg.mxu0
    %v700 = vadd.f32 %v616, %v638
    %v701 = vadd.f32 %v617, %v658
    %v702 = vadd.f32 %v618, %v678
    %v703 = vadd.f32 %v619, %v698
    %v704 = vxor.u32 %v700, 2147483648
    %v705 = vmul.f32 %v704, 1.442695
    %v706 = vpow.pop %v705
    %v707 = vadd.f32 %v706, 1.0
    %v708 = vrcp.pop %v707
    %v709 = vmul.f32 %v707, %v708
    %v710 = vsub.f32 1.0, %v709
    %v711 = vmul.f32 %v708, %v710
    %v712 = vadd.f32 %v708, %v711
    %vm713 = vweird.f32 %v707
    %vm714 = vweird.f32 %v708
    %vm715 = vmor %vm713, %vm714
    %v716 = vsel %vm715, %v708, %v712
    %v717 = vand.u32 2147483647, %v707
    %vm718 = vcmp.eq.f32.partialorder %v717, 8.507059e+37
    %v719 = vand.u32 %v707, 2147483648
    %v720 = vor.u32 1.1754944e-38, %v719
    %v721 = vsel %vm718, %v720, %v716
    %v722 = vmul.f32 1.0, %v721
    %v723 = vxor.u32 %v701, 2147483648
    %v724 = vmul.f32 %v723, 1.442695
    %v725 = vpow.pop %v724
    %v726 = vadd.f32 %v725, 1.0
    %v727 = vrcp.pop %v726
    %v728 = vmul.f32 %v726, %v727
    %v729 = vsub.f32 1.0, %v728
    %v730 = vmul.f32 %v727, %v729
    %v731 = vadd.f32 %v727, %v730
    %vm732 = vweird.f32 %v726
    %vm733 = vweird.f32 %v727
    %vm734 = vmor %vm732, %vm733
    %v735 = vsel %vm734, %v727, %v731
    %v736 = vand.u32 2147483647, %v726
    %vm737 = vcmp.eq.f32.partialorder %v736, 8.507059e+37
    %v738 = vand.u32 %v726, 2147483648
    %v739 = vor.u32 1.1754944e-38, %v738
    %v740 = vsel %vm737, %v739, %v735
    %v741 = vmul.f32 1.0, %v740
    %v742 = vtanh.pop %v702
    %v743 = vxor.u32 %v703, 2147483648
    %v744 = vmul.f32 %v743, 1.442695
    %v745 = vpow.pop %v744
    %v746 = vadd.f32 %v745, 1.0
    %v747 = vrcp.pop %v746
    %v748 = vmul.f32 %v746, %v747
    %v749 = vsub.f32 1.0, %v748
    %v750 = vmul.f32 %v747, %v749
    %v751 = vadd.f32 %v747, %v750
    %vm752 = vweird.f32 %v746
    %vm753 = vweird.f32 %v747
    %vm754 = vmor %vm752, %vm753
    %v755 = vsel %vm754, %v747, %v751
    %v756 = vand.u32 2147483647, %v746
    %vm757 = vcmp.eq.f32.partialorder %v756, 8.507059e+37
    %v758 = vand.u32 %v746, 2147483648
    %v759 = vor.u32 1.1754944e-38, %v758
    %v760 = vsel %vm757, %v759, %v755
    %v761 = vmul.f32 1.0, %v760
    %v762 = vmul.f32 %v741, %v613
    %v763 = vmul.f32 %v722, %v742
    %v764 = vadd.f32 %v762, %v763
    %v765 = vtanh.pop %v764
    %v766 = vmul.f32 %v761, %v765
    %v767 = vld [vmem:[#allocation2 + $0x80] sm:$0xff]
    %v768 = vld [vmem:[#allocation2 + $0x88] sm:$0xff]
    %v769 = vld [vmem:[#allocation2 + $0x90] sm:$0xff]
    %v770 = vld [vmem:[#allocation2 + $0x98] sm:$0xff]
    %771 = vmatpush.msra.mxu0 %v314
    %772 = vmatpush.msra.mxu0 %v310
    %773 = vmatpush.msra.mxu0 %v306
    %774 = vmatpush.msra.mxu0 %v302
    %775 = vmatpush.msra.mxu0 %v298
    %776 = vmatpush.msra.mxu0 %v294
    %777 = vmatpush.msra.mxu0 %v290
    %778 = vmatpush.msra.mxu0 %v286
    %779 = vmatpush.msra.mxu0 %v282
    %780 = vmatpush.msra.mxu0 %v278
    %781 = vmatpush.msra.mxu0 %v274
    %782 = vmatpush.msra.mxu0 %v270
    %783 = vmatpush.msra.mxu0 %v266
    %784 = vmatpush.msra.mxu0 %v262
    %785 = vmatpush.msra.mxu0 %v258
    %786 = vmatpush.msra.mxu0 %v254
    %787 = vmatmul.f32.gmra.mxu0 %v766
    %v788 = vpop.f32.mrf.mxu0
    %v789 = vadd.f32 0.0, %v788
    %790 = vdwg.mxu0
    %791 = vmatpush.msra.mxu0 %v315
    %792 = vmatpush.msra.mxu0 %v311
    %793 = vmatpush.msra.mxu0 %v307
    %794 = vmatpush.msra.mxu0 %v303
    %795 = vmatpush.msra.mxu0 %v299
    %796 = vmatpush.msra.mxu0 %v295
    %797 = vmatpush.msra.mxu0 %v291
    %798 = vmatpush.msra.mxu0 %v287
    %799 = vmatpush.msra.mxu0 %v283
    %800 = vmatpush.msra.mxu0 %v279
    %801 = vmatpush.msra.mxu0 %v275
    %802 = vmatpush.msra.mxu0 %v271
    %803 = vmatpush.msra.mxu0 %v267
    %804 = vmatpush.msra.mxu0 %v263
    %805 = vmatpush.msra.mxu0 %v259
    %806 = vmatpush.msra.mxu0 %v255
    %807 = vmatmul.f32.gmra.mxu0 %v766
    %v808 = vpop.f32.mrf.mxu0
    %v809 = vadd.f32 0.0, %v808
    %810 = vdwg.mxu0
    %811 = vmatpush.msra.mxu0 %v316
    %812 = vmatpush.msra.mxu0 %v312
    %813 = vmatpush.msra.mxu0 %v308
    %814 = vmatpush.msra.mxu0 %v304
    %815 = vmatpush.msra.mxu0 %v300
    %816 = vmatpush.msra.mxu0 %v296
    %817 = vmatpush.msra.mxu0 %v292
    %818 = vmatpush.msra.mxu0 %v288
    %819 = vmatpush.msra.mxu0 %v284
    %820 = vmatpush.msra.mxu0 %v280
    %821 = vmatpush.msra.mxu0 %v276
    %822 = vmatpush.msra.mxu0 %v272
    %823 = vmatpush.msra.mxu0 %v268
    %824 = vmatpush.msra.mxu0 %v264
    %825 = vmatpush.msra.mxu0 %v260
    %826 = vmatpush.msra.mxu0 %v256
    %827 = vmatmul.f32.gmra.mxu0 %v766
    %v828 = vpop.f32.mrf.mxu0
    %v829 = vadd.f32 0.0, %v828
    %830 = vdwg.mxu0
    %831 = vmatpush.msra.mxu0 %v317
    %832 = vmatpush.msra.mxu0 %v313
    %833 = vmatpush.msra.mxu0 %v309
    %834 = vmatpush.msra.mxu0 %v305
    %835 = vmatpush.msra.mxu0 %v301
    %836 = vmatpush.msra.mxu0 %v297
    %837 = vmatpush.msra.mxu0 %v293
    %838 = vmatpush.msra.mxu0 %v289
    %839 = vmatpush.msra.mxu0 %v285
    %840 = vmatpush.msra.mxu0 %v281
    %841 = vmatpush.msra.mxu0 %v277
    %842 = vmatpush.msra.mxu0 %v273
    %843 = vmatpush.msra.mxu0 %v269
    %844 = vmatpush.msra.mxu0 %v265
    %845 = vmatpush.msra.mxu0 %v261
    %846 = vmatpush.msra.mxu0 %v257
    %847 = vmatmul.f32.gmra.mxu0 %v766
    %v848 = vpop.f32.mrf.mxu0
    %v849 = vadd.f32 0.0, %v848
    %850 = vdwg.mxu0
    %v851 = vadd.f32 %v767, %v789
    %v852 = vadd.f32 %v768, %v809
    %v853 = vadd.f32 %v769, %v829
    %v854 = vadd.f32 %v770, %v849
    %v855 = vxor.u32 %v851, 2147483648
    %v856 = vmul.f32 %v855, 1.442695
    %v857 = vpow.pop %v856
    %v858 = vadd.f32 %v857, 1.0
    %v859 = vrcp.pop %v858
    %v860 = vmul.f32 %v858, %v859
    %v861 = vsub.f32 1.0, %v860
    %v862 = vmul.f32 %v859, %v861
    %v863 = vadd.f32 %v859, %v862
    %vm864 = vweird.f32 %v858
    %vm865 = vweird.f32 %v859
    %vm866 = vmor %vm864, %vm865
    %v867 = vsel %vm866, %v859, %v863
    %v868 = vand.u32 2147483647, %v858
    %vm869 = vcmp.eq.f32.partialorder %v868, 8.507059e+37
    %v870 = vand.u32 %v858, 2147483648
    %v871 = vor.u32 1.1754944e-38, %v870
    %v872 = vsel %vm869, %v871, %v867
    %v873 = vmul.f32 1.0, %v872
    %v874 = vxor.u32 %v852, 2147483648
    %v875 = vmul.f32 %v874, 1.442695
    %v876 = vpow.pop %v875
    %v877 = vadd.f32 %v876, 1.0
    %v878 = vrcp.pop %v877
    %v879 = vmul.f32 %v877, %v878
    %v880 = vsub.f32 1.0, %v879
    %v881 = vmul.f32 %v878, %v880
    %v882 = vadd.f32 %v878, %v881
    %vm883 = vweird.f32 %v877
    %vm884 = vweird.f32 %v878
    %vm885 = vmor %vm883, %vm884
    %v886 = vsel %vm885, %v878, %v882
    %v887 = vand.u32 2147483647, %v877
    %vm888 = vcmp.eq.f32.partialorder %v887, 8.507059e+37
    %v889 = vand.u32 %v877, 2147483648
    %v890 = vor.u32 1.1754944e-38, %v889
    %v891 = vsel %vm888, %v890, %v886
    %v892 = vmul.f32 1.0, %v891
    %v893 = vtanh.pop %v853
    %v894 = vxor.u32 %v854, 2147483648
    %v895 = vmul.f32 %v894, 1.442695
    %v896 = vpow.pop %v895
    %v897 = vadd.f32 %v896, 1.0
    %v898 = vrcp.pop %v897
    %v899 = vmul.f32 %v897, %v898
    %v900 = vsub.f32 1.0, %v899
    %v901 = vmul.f32 %v898, %v900
    %v902 = vadd.f32 %v898, %v901
    %vm903 = vweird.f32 %v897
    %vm904 = vweird.f32 %v898
    %vm905 = vmor %vm903, %vm904
    %v906 = vsel %vm905, %v898, %v902
    %v907 = vand.u32 2147483647, %v897
    %vm908 = vcmp.eq.f32.partialorder %v907, 8.507059e+37
    %v909 = vand.u32 %v897, 2147483648
    %v910 = vor.u32 1.1754944e-38, %v909
    %v911 = vsel %vm908, %v910, %v906
    %v912 = vmul.f32 1.0, %v911
    %v913 = vmul.f32 %v892, %v764
    %v914 = vmul.f32 %v873, %v893
    %v915 = vadd.f32 %v913, %v914
    %v916 = vtanh.pop %v915
    %v917 = vmul.f32 %v912, %v916
    %v918 = vld [vmem:[#allocation2 + $0xa0] sm:$0xff]
    %v919 = vld [vmem:[#allocation2 + $0xa8] sm:$0xff]
    %v920 = vld [vmem:[#allocation2 + $0xb0] sm:$0xff]
    %v921 = vld [vmem:[#allocation2 + $0xb8] sm:$0xff]
    %922 = vmatpush.msra.mxu0 %v314
    %923 = vmatpush.msra.mxu0 %v310
    %924 = vmatpush.msra.mxu0 %v306
    %925 = vmatpush.msra.mxu0 %v302
    %926 = vmatpush.msra.mxu0 %v298
    %927 = vmatpush.msra.mxu0 %v294
    %928 = vmatpush.msra.mxu0 %v290
    %929 = vmatpush.msra.mxu0 %v286
    %930 = vmatpush.msra.mxu0 %v282
    %931 = vmatpush.msra.mxu0 %v278
    %932 = vmatpush.msra.mxu0 %v274
    %933 = vmatpush.msra.mxu0 %v270
    %934 = vmatpush.msra.mxu0 %v266
    %935 = vmatpush.msra.mxu0 %v262
    %936 = vmatpush.msra.mxu0 %v258
    %937 = vmatpush.msra.mxu0 %v254
    %938 = vmatmul.f32.gmra.mxu0 %v917
    %v939 = vpop.f32.mrf.mxu0
    %v940 = vadd.f32 0.0, %v939
    %941 = vdwg.mxu0
    %942 = vmatpush.msra.mxu0 %v315
    %943 = vmatpush.msra.mxu0 %v311
    %944 = vmatpush.msra.mxu0 %v307
    %945 = vmatpush.msra.mxu0 %v303
    %946 = vmatpush.msra.mxu0 %v299
    %947 = vmatpush.msra.mxu0 %v295
    %948 = vmatpush.msra.mxu0 %v291
    %949 = vmatpush.msra.mxu0 %v287
    %950 = vmatpush.msra.mxu0 %v283
    %951 = vmatpush.msra.mxu0 %v279
    %952 = vmatpush.msra.mxu0 %v275
    %953 = vmatpush.msra.mxu0 %v271
    %954 = vmatpush.msra.mxu0 %v267
    %955 = vmatpush.msra.mxu0 %v263
    %956 = vmatpush.msra.mxu0 %v259
    %957 = vmatpush.msra.mxu0 %v255
    %958 = vmatmul.f32.gmra.mxu0 %v917
    %v959 = vpop.f32.mrf.mxu0
    %v960 = vadd.f32 0.0, %v959
    %961 = vdwg.mxu0
    %962 = vmatpush.msra.mxu0 %v316
    %963 = vmatpush.msra.mxu0 %v312
    %964 = vmatpush.msra.mxu0 %v308
    %965 = vmatpush.msra.mxu0 %v304
    %966 = vmatpush.msra.mxu0 %v300
    %967 = vmatpush.msra.mxu0 %v296
    %968 = vmatpush.msra.mxu0 %v292
    %969 = vmatpush.msra.mxu0 %v288
    %970 = vmatpush.msra.mxu0 %v284
    %971 = vmatpush.msra.mxu0 %v280
    %972 = vmatpush.msra.mxu0 %v276
    %973 = vmatpush.msra.mxu0 %v272
    %974 = vmatpush.msra.mxu0 %v268
    %975 = vmatpush.msra.mxu0 %v264
    %976 = vmatpush.msra.mxu0 %v260
    %977 = vmatpush.msra.mxu0 %v256
    %978 = vmatmul.f32.gmra.mxu0 %v917
    %v979 = vpop.f32.mrf.mxu0
    %v980 = vadd.f32 0.0, %v979
    %981 = vdwg.mxu0
    %982 = vmatpush.msra.mxu0 %v317
    %983 = vmatpush.msra.mxu0 %v313
    %984 = vmatpush.msra.mxu0 %v309
    %985 = vmatpush.msra.mxu0 %v305
    %986 = vmatpush.msra.mxu0 %v301
    %987 = vmatpush.msra.mxu0 %v297
    %988 = vmatpush.msra.mxu0 %v293
    %989 = vmatpush.msra.mxu0 %v289
    %990 = vmatpush.msra.mxu0 %v285
    %991 = vmatpush.msra.mxu0 %v281
    %992 = vmatpush.msra.mxu0 %v277
    %993 = vmatpush.msra.mxu0 %v273
    %994 = vmatpush.msra.mxu0 %v269
    %995 = vmatpush.msra.mxu0 %v265
    %996 = vmatpush.msra.mxu0 %v261
    %997 = vmatpush.msra.mxu0 %v257
    %998 = vmatmul.f32.gmra.mxu0 %v917
    %v999 = vpop.f32.mrf.mxu0
    %v1000 = vadd.f32 0.0, %v999
    %1001 = vdwg.mxu0
    %v1002 = vadd.f32 %v918, %v940
    %v1003 = vadd.f32 %v919, %v960
    %v1004 = vadd.f32 %v920, %v980
    %v1005 = vadd.f32 %v921, %v1000
    %v1006 = vxor.u32 %v1002, 2147483648
    %v1007 = vmul.f32 %v1006, 1.442695
    %v1008 = vpow.pop %v1007
    %v1009 = vadd.f32 %v1008, 1.0
    %v1010 = vrcp.pop %v1009
    %v1011 = vmul.f32 %v1009, %v1010
    %v1012 = vsub.f32 1.0, %v1011
    %v1013 = vmul.f32 %v1010, %v1012
    %v1014 = vadd.f32 %v1010, %v1013
    %vm1015 = vweird.f32 %v1009
    %vm1016 = vweird.f32 %v1010
    %vm1017 = vmor %vm1015, %vm1016
    %v1018 = vsel %vm1017, %v1010, %v1014
    %v1019 = vand.u32 2147483647, %v1009
    %vm1020 = vcmp.eq.f32.partialorder %v1019, 8.507059e+37
    %v1021 = vand.u32 %v1009, 2147483648
    %v1022 = vor.u32 1.1754944e-38, %v1021
    %v1023 = vsel %vm1020, %v1022, %v1018
    %v1024 = vmul.f32 1.0, %v1023
    %v1025 = vxor.u32 %v1003, 2147483648
    %v1026 = vmul.f32 %v1025, 1.442695
    %v1027 = vpow.pop %v1026
    %v1028 = vadd.f32 %v1027, 1.0
    %v1029 = vrcp.pop %v1028
    %v1030 = vmul.f32 %v1028, %v1029
    %v1031 = vsub.f32 1.0, %v1030
    %v1032 = vmul.f32 %v1029, %v1031
    %v1033 = vadd.f32 %v1029, %v1032
    %vm1034 = vweird.f32 %v1028
    %vm1035 = vweird.f32 %v1029
    %vm1036 = vmor %vm1034, %vm1035
    %v1037 = vsel %vm1036, %v1029, %v1033
    %v1038 = vand.u32 2147483647, %v1028
    %vm1039 = vcmp.eq.f32.partialorder %v1038, 8.507059e+37
    %v1040 = vand.u32 %v1028, 2147483648
    %v1041 = vor.u32 1.1754944e-38, %v1040
    %v1042 = vsel %vm1039, %v1041, %v1037
    %v1043 = vmul.f32 1.0, %v1042
    %v1044 = vtanh.pop %v1004
    %v1045 = vxor.u32 %v1005, 2147483648
    %v1046 = vmul.f32 %v1045, 1.442695
    %v1047 = vpow.pop %v1046
    %v1048 = vadd.f32 %v1047, 1.0
    %v1049 = vrcp.pop %v1048
    %v1050 = vmul.f32 %v1048, %v1049
    %v1051 = vsub.f32 1.0, %v1050
    %v1052 = vmul.f32 %v1049, %v1051
    %v1053 = vadd.f32 %v1049, %v1052
    %vm1054 = vweird.f32 %v1048
    %vm1055 = vweird.f32 %v1049
    %vm1056 = vmor %vm1054, %vm1055
    %v1057 = vsel %vm1056, %v1049, %v1053
    %v1058 = vand.u32 2147483647, %v1048
    %vm1059 = vcmp.eq.f32.partialorder %v1058, 8.507059e+37
    %v1060 = vand.u32 %v1048, 2147483648
    %v1061 = vor.u32 1.1754944e-38, %v1060
    %v1062 = vsel %vm1059, %v1061, %v1057
    %v1063 = vmul.f32 1.0, %v1062
    %v1064 = vmul.f32 %v1043, %v915
    %v1065 = vmul.f32 %v1024, %v1044
    %v1066 = vadd.f32 %v1064, %v1065
    %v1067 = vtanh.pop %v1066
    %v1068 = vmul.f32 %v1063, %v1067
    %v1069 = vld [vmem:[#allocation2 + $0xc0] sm:$0xff]
    %v1070 = vld [vmem:[#allocation2 + $0xc8] sm:$0xff]
    %v1071 = vld [vmem:[#allocation2 + $0xd0] sm:$0xff]
    %v1072 = vld [vmem:[#allocation2 + $0xd8] sm:$0xff]
    %1073 = vmatpush.msra.mxu0 %v314
    %1074 = vmatpush.msra.mxu0 %v310
    %1075 = vmatpush.msra.mxu0 %v306
    %1076 = vmatpush.msra.mxu0 %v302
    %1077 = vmatpush.msra.mxu0 %v298
    %1078 = vmatpush.msra.mxu0 %v294
    %1079 = vmatpush.msra.mxu0 %v290
    %1080 = vmatpush.msra.mxu0 %v286
    %1081 = vmatpush.msra.mxu0 %v282
    %1082 = vmatpush.msra.mxu0 %v278
    %1083 = vmatpush.msra.mxu0 %v274
    %1084 = vmatpush.msra.mxu0 %v270
    %1085 = vmatpush.msra.mxu0 %v266
    %1086 = vmatpush.msra.mxu0 %v262
    %1087 = vmatpush.msra.mxu0 %v258
    %1088 = vmatpush.msra.mxu0 %v254
    %1089 = vmatmul.f32.gmra.mxu0 %v1068
    %v1090 = vpop.f32.mrf.mxu0
    %v1091 = vadd.f32 0.0, %v1090
    %1092 = vdwg.mxu0
    %1093 = vmatpush.msra.mxu0 %v315
    %1094 = vmatpush.msra.mxu0 %v311
    %1095 = vmatpush.msra.mxu0 %v307
    %1096 = vmatpush.msra.mxu0 %v303
    %1097 = vmatpush.msra.mxu0 %v299
    %1098 = vmatpush.msra.mxu0 %v295
    %1099 = vmatpush.msra.mxu0 %v291
    %1100 = vmatpush.msra.mxu0 %v287
    %1101 = vmatpush.msra.mxu0 %v283
    %1102 = vmatpush.msra.mxu0 %v279
    %1103 = vmatpush.msra.mxu0 %v275
    %1104 = vmatpush.msra.mxu0 %v271
    %1105 = vmatpush.msra.mxu0 %v267
    %1106 = vmatpush.msra.mxu0 %v263
    %1107 = vmatpush.msra.mxu0 %v259
    %1108 = vmatpush.msra.mxu0 %v255
    %1109 = vmatmul.f32.gmra.mxu0 %v1068
    %v1110 = vpop.f32.mrf.mxu0
    %v1111 = vadd.f32 0.0, %v1110
    %1112 = vdwg.mxu0
    %1113 = vmatpush.msra.mxu0 %v316
    %1114 = vmatpush.msra.mxu0 %v312
    %1115 = vmatpush.msra.mxu0 %v308
    %1116 = vmatpush.msra.mxu0 %v304
    %1117 = vmatpush.msra.mxu0 %v300
    %1118 = vmatpush.msra.mxu0 %v296
    %1119 = vmatpush.msra.mxu0 %v292
    %1120 = vmatpush.msra.mxu0 %v288
    %1121 = vmatpush.msra.mxu0 %v284
    %1122 = vmatpush.msra.mxu0 %v280
    %1123 = vmatpush.msra.mxu0 %v276
    %1124 = vmatpush.msra.mxu0 %v272
    %1125 = vmatpush.msra.mxu0 %v268
    %1126 = vmatpush.msra.mxu0 %v264
    %1127 = vmatpush.msra.mxu0 %v260
    %1128 = vmatpush.msra.mxu0 %v256
    %1129 = vmatmul.f32.gmra.mxu0 %v1068
    %v1130 = vpop.f32.mrf.mxu0
    %v1131 = vadd.f32 0.0, %v1130
    %1132 = vdwg.mxu0
    %1133 = vmatpush.msra.mxu0 %v317
    %1134 = vmatpush.msra.mxu0 %v313
    %1135 = vmatpush.msra.mxu0 %v309
    %1136 = vmatpush.msra.mxu0 %v305
    %1137 = vmatpush.msra.mxu0 %v301
    %1138 = vmatpush.msra.mxu0 %v297
    %1139 = vmatpush.msra.mxu0 %v293
    %1140 = vmatpush.msra.mxu0 %v289
    %1141 = vmatpush.msra.mxu0 %v285
    %1142 = vmatpush.msra.mxu0 %v281
    %1143 = vmatpush.msra.mxu0 %v277
    %1144 = vmatpush.msra.mxu0 %v273
    %1145 = vmatpush.msra.mxu0 %v269
    %1146 = vmatpush.msra.mxu0 %v265
    %1147 = vmatpush.msra.mxu0 %v261
    %1148 = vmatpush.msra.mxu0 %v257
    %1149 = vmatmul.f32.gmra.mxu0 %v1068
    %v1150 = vpop.f32.mrf.mxu0
    %v1151 = vadd.f32 0.0, %v1150
    %1152 = vdwg.mxu0
    %v1153 = vadd.f32 %v1069, %v1091
    %v1154 = vadd.f32 %v1070, %v1111
    %v1155 = vadd.f32 %v1071, %v1131
    %v1156 = vadd.f32 %v1072, %v1151
    %v1157 = vxor.u32 %v1153, 2147483648
    %v1158 = vmul.f32 %v1157, 1.442695
    %v1159 = vpow.pop %v1158
    %v1160 = vadd.f32 %v1159, 1.0
    %v1161 = vrcp.pop %v1160
    %v1162 = vmul.f32 %v1160, %v1161
    %v1163 = vsub.f32 1.0, %v1162
    %v1164 = vmul.f32 %v1161, %v1163
    %v1165 = vadd.f32 %v1161, %v1164
    %vm1166 = vweird.f32 %v1160
    %vm1167 = vweird.f32 %v1161
    %vm1168 = vmor %vm1166, %vm1167
    %v1169 = vsel %vm1168, %v1161, %v1165
    %v1170 = vand.u32 2147483647, %v1160
    %vm1171 = vcmp.eq.f32.partialorder %v1170, 8.507059e+37
    %v1172 = vand.u32 %v1160, 2147483648
    %v1173 = vor.u32 1.1754944e-38, %v1172
    %v1174 = vsel %vm1171, %v1173, %v1169
    %v1175 = vmul.f32 1.0, %v1174
    %v1176 = vxor.u32 %v1154, 2147483648
    %v1177 = vmul.f32 %v1176, 1.442695
    %v1178 = vpow.pop %v1177
    %v1179 = vadd.f32 %v1178, 1.0
    %v1180 = vrcp.pop %v1179
    %v1181 = vmul.f32 %v1179, %v1180
    %v1182 = vsub.f32 1.0, %v1181
    %v1183 = vmul.f32 %v1180, %v1182
    %v1184 = vadd.f32 %v1180, %v1183
    %vm1185 = vweird.f32 %v1179
    %vm1186 = vweird.f32 %v1180
    %vm1187 = vmor %vm1185, %vm1186
    %v1188 = vsel %vm1187, %v1180, %v1184
    %v1189 = vand.u32 2147483647, %v1179
    %vm1190 = vcmp.eq.f32.partialorder %v1189, 8.507059e+37
    %v1191 = vand.u32 %v1179, 2147483648
    %v1192 = vor.u32 1.1754944e-38, %v1191
    %v1193 = vsel %vm1190, %v1192, %v1188
    %v1194 = vmul.f32 1.0, %v1193
    %v1195 = vtanh.pop %v1155
    %v1196 = vxor.u32 %v1156, 2147483648
    %v1197 = vmul.f32 %v1196, 1.442695
    %v1198 = vpow.pop %v1197
    %v1199 = vadd.f32 %v1198, 1.0
    %v1200 = vrcp.pop %v1199
    %v1201 = vmul.f32 %v1199, %v1200
    %v1202 = vsub.f32 1.0, %v1201
    %v1203 = vmul.f32 %v1200, %v1202
    %v1204 = vadd.f32 %v1200, %v1203
    %vm1205 = vweird.f32 %v1199
    %vm1206 = vweird.f32 %v1200
    %vm1207 = vmor %vm1205, %vm1206
    %v1208 = vsel %vm1207, %v1200, %v1204
    %v1209 = vand.u32 2147483647, %v1199
    %vm1210 = vcmp.eq.f32.partialorder %v1209, 8.507059e+37
    %v1211 = vand.u32 %v1199, 2147483648
    %v1212 = vor.u32 1.1754944e-38, %v1211
    %v1213 = vsel %vm1210, %v1212, %v1208
    %v1214 = vmul.f32 1.0, %v1213
    %v1215 = vmul.f32 %v1194, %v1066
    %v1216 = vmul.f32 %v1175, %v1195
    %v1217 = vadd.f32 %v1215, %v1216
    %v1218 = vtanh.pop %v1217
    %v1219 = vmul.f32 %v1214, %v1218
    %v1220 = vld [vmem:[#allocation2 + $0xe0] sm:$0xff]
    %v1221 = vld [vmem:[#allocation2 + $0xe8] sm:$0xff]
    %v1222 = vld [vmem:[#allocation2 + $0xf0] sm:$0xff]
    %v1223 = vld [vmem:[#allocation2 + $0xf8] sm:$0xff]
    %1224 = vmatpush.msra.mxu0 %v314
    %1225 = vmatpush.msra.mxu0 %v310
    %1226 = vmatpush.msra.mxu0 %v306
    %1227 = vmatpush.msra.mxu0 %v302
    %1228 = vmatpush.msra.mxu0 %v298
    %1229 = vmatpush.msra.mxu0 %v294
    %1230 = vmatpush.msra.mxu0 %v290
    %1231 = vmatpush.msra.mxu0 %v286
    %1232 = vmatpush.msra.mxu0 %v282
    %1233 = vmatpush.msra.mxu0 %v278
    %1234 = vmatpush.msra.mxu0 %v274
    %1235 = vmatpush.msra.mxu0 %v270
    %1236 = vmatpush.msra.mxu0 %v266
    %1237 = vmatpush.msra.mxu0 %v262
    %1238 = vmatpush.msra.mxu0 %v258
    %1239 = vmatpush.msra.mxu0 %v254
    %1240 = vmatmul.f32.gmra.mxu0 %v1219
    %v1241 = vpop.f32.mrf.mxu0
    %v1242 = vadd.f32 0.0, %v1241
    %1243 = vdwg.mxu0
    %1244 = vmatpush.msra.mxu0 %v315
    %1245 = vmatpush.msra.mxu0 %v311
    %1246 = vmatpush.msra.mxu0 %v307
    %1247 = vmatpush.msra.mxu0 %v303
    %1248 = vmatpush.msra.mxu0 %v299
    %1249 = vmatpush.msra.mxu0 %v295
    %1250 = vmatpush.msra.mxu0 %v291
    %1251 = vmatpush.msra.mxu0 %v287
    %1252 = vmatpush.msra.mxu0 %v283
    %1253 = vmatpush.msra.mxu0 %v279
    %1254 = vmatpush.msra.mxu0 %v275
    %1255 = vmatpush.msra.mxu0 %v271
    %1256 = vmatpush.msra.mxu0 %v267
    %1257 = vmatpush.msra.mxu0 %v263
    %1258 = vmatpush.msra.mxu0 %v259
    %1259 = vmatpush.msra.mxu0 %v255
    %1260 = vmatmul.f32.gmra.mxu0 %v1219
    %v1261 = vpop.f32.mrf.mxu0
    %v1262 = vadd.f32 0.0, %v1261
    %1263 = vdwg.mxu0
    %1264 = vmatpush.msra.mxu0 %v316
    %1265 = vmatpush.msra.mxu0 %v312
    %1266 = vmatpush.msra.mxu0 %v308
    %1267 = vmatpush.msra.mxu0 %v304
    %1268 = vmatpush.msra.mxu0 %v300
    %1269 = vmatpush.msra.mxu0 %v296
    %1270 = vmatpush.msra.mxu0 %v292
    %1271 = vmatpush.msra.mxu0 %v288
    %1272 = vmatpush.msra.mxu0 %v284
    %1273 = vmatpush.msra.mxu0 %v280
    %1274 = vmatpush.msra.mxu0 %v276
    %1275 = vmatpush.msra.mxu0 %v272
    %1276 = vmatpush.msra.mxu0 %v268
    %1277 = vmatpush.msra.mxu0 %v264
    %1278 = vmatpush.msra.mxu0 %v260
    %1279 = vmatpush.msra.mxu0 %v256
    %1280 = vmatmul.f32.gmra.mxu0 %v1219
    %v1281 = vpop.f32.mrf.mxu0
    %v1282 = vadd.f32 0.0, %v1281
    %1283 = vdwg.mxu0
    %1284 = vmatpush.msra.mxu0 %v317
    %1285 = vmatpush.msra.mxu0 %v313
    %1286 = vmatpush.msra.mxu0 %v309
    %1287 = vmatpush.msra.mxu0 %v305
    %1288 = vmatpush.msra.mxu0 %v301
    %1289 = vmatpush.msra.mxu0 %v297
    %1290 = vmatpush.msra.mxu0 %v293
    %1291 = vmatpush.msra.mxu0 %v289
    %1292 = vmatpush.msra.mxu0 %v285
    %1293 = vmatpush.msra.mxu0 %v281
    %1294 = vmatpush.msra.mxu0 %v277
    %1295 = vmatpush.msra.mxu0 %v273
    %1296 = vmatpush.msra.mxu0 %v269
    %1297 = vmatpush.msra.mxu0 %v265
    %1298 = vmatpush.msra.mxu0 %v261
    %1299 = vmatpush.msra.mxu0 %v257
    %1300 = vmatmul.f32.gmra.mxu0 %v1219
    %v1301 = vpop.f32.mrf.mxu0
    %v1302 = vadd.f32 0.0, %v1301
    %1303 = vdwg.mxu0
    %v1304 = vadd.f32 %v1220, %v1242
    %v1305 = vadd.f32 %v1221, %v1262
    %v1306 = vadd.f32 %v1222, %v1282
    %v1307 = vadd.f32 %v1223, %v1302
    %v1308 = vxor.u32 %v1304, 2147483648
    %v1309 = vmul.f32 %v1308, 1.442695
    %v1310 = vpow.pop %v1309
    %v1311 = vadd.f32 %v1310, 1.0
    %v1312 = vrcp.pop %v1311
    %v1313 = vmul.f32 %v1311, %v1312
    %v1314 = vsub.f32 1.0, %v1313
    %v1315 = vmul.f32 %v1312, %v1314
    %v1316 = vadd.f32 %v1312, %v1315
    %vm1317 = vweird.f32 %v1311
    %vm1318 = vweird.f32 %v1312
    %vm1319 = vmor %vm1317, %vm1318
    %v1320 = vsel %vm1319, %v1312, %v1316
    %v1321 = vand.u32 2147483647, %v1311
    %vm1322 = vcmp.eq.f32.partialorder %v1321, 8.507059e+37
    %v1323 = vand.u32 %v1311, 2147483648
    %v1324 = vor.u32 1.1754944e-38, %v1323
    %v1325 = vsel %vm1322, %v1324, %v1320
    %v1326 = vmul.f32 1.0, %v1325
    %v1327 = vxor.u32 %v1305, 2147483648
    %v1328 = vmul.f32 %v1327, 1.442695
    %v1329 = vpow.pop %v1328
    %v1330 = vadd.f32 %v1329, 1.0
    %v1331 = vrcp.pop %v1330
    %v1332 = vmul.f32 %v1330, %v1331
    %v1333 = vsub.f32 1.0, %v1332
    %v1334 = vmul.f32 %v1331, %v1333
    %v1335 = vadd.f32 %v1331, %v1334
    %vm1336 = vweird.f32 %v1330
    %vm1337 = vweird.f32 %v1331
    %vm1338 = vmor %vm1336, %vm1337
    %v1339 = vsel %vm1338, %v1331, %v1335
    %v1340 = vand.u32 2147483647, %v1330
    %vm1341 = vcmp.eq.f32.partialorder %v1340, 8.507059e+37
    %v1342 = vand.u32 %v1330, 2147483648
    %v1343 = vor.u32 1.1754944e-38, %v1342
    %v1344 = vsel %vm1341, %v1343, %v1339
    %v1345 = vmul.f32 1.0, %v1344
    %v1346 = vtanh.pop %v1306
    %v1347 = vxor.u32 %v1307, 2147483648
    %v1348 = vmul.f32 %v1347, 1.442695
    %v1349 = vpow.pop %v1348
    %v1350 = vadd.f32 %v1349, 1.0
    %v1351 = vrcp.pop %v1350
    %v1352 = vmul.f32 %v1350, %v1351
    %v1353 = vsub.f32 1.0, %v1352
    %v1354 = vmul.f32 %v1351, %v1353
    %v1355 = vadd.f32 %v1351, %v1354
    %vm1356 = vweird.f32 %v1350
    %vm1357 = vweird.f32 %v1351
    %vm1358 = vmor %vm1356, %vm1357
    %v1359 = vsel %vm1358, %v1351, %v1355
    %v1360 = vand.u32 2147483647, %v1350
    %vm1361 = vcmp.eq.f32.partialorder %v1360, 8.507059e+37
    %v1362 = vand.u32 %v1350, 2147483648
    %v1363 = vor.u32 1.1754944e-38, %v1362
    %v1364 = vsel %vm1361, %v1363, %v1359
    %v1365 = vmul.f32 1.0, %v1364
    %v1366 = vmul.f32 %v1345, %v1217
    %v1367 = vmul.f32 %v1326, %v1346
    %v1368 = vadd.f32 %v1366, %v1367
    %v1369 = vtanh.pop %v1368
    %v1370 = vmul.f32 %v1365, %v1369
    %v1371 = vld [vmem:[%s4] sm:$0x1]
    %v1373 = vperm.slane %v1371, 0
    %v1375 = vmul.f32 %v1370, %v1373
    %1376 = vadd.xlane.f32.xlu0 %v1375
    %v1377 = vpop.xlane.xlu0 %1376
    %v1378 = vld [vmem:[#allocation3] sm:$0x1]
    %v1380 = vperm.slane %v1378, 0
    %v1382 = vadd.f32 %v1377, %v1380
    %vm1383 = vcmask 7168
    %1384 = vst.msk [vmem:[%s6] sm:$0xff] %vm1383, %v1382
    // Predicated region
    $region30: #{rainfall_lstm_forward.1} parent=1 // pred_check
      _
    $region31: #{rainfall_lstm_forward.1} parent=1 // pred_check_branch
      %1386 = sbr.rel (0) target = $region33
    $region32: #{rainfall_lstm_forward.1} parent=1 // pred_region
      _
    $region33: #{rainfall_lstm_forward.1} parent=1 // pred_fallthru
      _
    // Predicated region
    $region34: #{rainfall_lstm_forward.1} parent=1 // pred_check
      _
    $region35: #{rainfall_lstm_forward.1} parent=1 // pred_check_branch
      %1388 = sbr.rel (0) target = $region37
    $region36: #{rainfall_lstm_forward.1} parent=1 // pred_region
      _
    $region37: #{rainfall_lstm_forward.1} parent=1 // pred_fallthru
      _
    %1389 = vsyncpa [#allocation5], 1

</llo_original>
